<compile_context>
chip_gen: v5e
topology: v5e:2x2
jax: 0.10.0
libtpu: 0.0.40
codegen_flags: <defaults>
</compile_context>

<pallas_src>
import jax
import jax.numpy as jnp
import numpy as np
from jax.experimental import pallas as pl
from jax.experimental.pallas import tpu as pltpu

# ------------------------- model hyperparameters -------------------------
INPUT_DIM = 4
HIDDEN_DIM = 32
OUTPUT_DIM = 4
NUM_LAYERS = 3

BATCH = 2
SEQ = 8
B_PAD = 8          # pad batch rows to one full sublane tile per timestep


# ------------------------------ Pallas kernel ------------------------------
def gru_kernel(x_ref, wih0_ref, wihr_ref, whh_ref, bi_ref, bhn_ref,
               wout_ref, bout_ref, o_ref):
    """Whole-sequence 3-layer GRU + Linear + sigmoid, single invocation.

    x_ref    : (S*B_PAD, D)   time-major rows (row index = t*B_PAD + b; b >= BATCH are zero pad)
    wih0_ref : (D, 3H)        layer-0 fused input weights, gate order [r, z, n]
    wihr_ref : (L-1, H, 3H)   fused input weights for layers >= 1
    whh_ref  : (L, H, 3H)     fused hidden weights
    bi_ref   : (L, 1, 3H)     fused biases: [b_ir+b_hr, b_iz+b_hz, b_in]
    bhn_ref  : (L, 1, H)      hidden n-gate bias (stays inside r * (.))
    wout_ref : (H, OUT),  bout_ref : (1, OUT)
    o_ref    : (S*B_PAD, OUT)
    """
    H, BP, S = HIDDEN_DIM, B_PAD, SEQ

    layer_in = x_ref[...]                                    # (S*BP, D)

    for layer in range(NUM_LAYERS):
        w_ih = wih0_ref[...] if layer == 0 else wihr_ref[layer - 1]   # (in, 3H)
        w_hh = whh_ref[layer]                                # (H, 3H)
        b_i = bi_ref[layer]                                  # (1, 3H)
        # Hoisted broadcast (JAX does not CSE broadcast_in_dim inside the unrolled loop).
        b_hn = jnp.broadcast_to(bhn_ref[layer], (BP, H))     # (BP, H)

        # Hoisted input->hidden projection for ALL timesteps at once (off the
        # sequential critical path): one (S*BP, in) @ (in, 3H) MXU call per layer.
        gi = jnp.dot(layer_in, w_ih, preferred_element_type=jnp.float32) + b_i

        h = jnp.zeros((BP, H), jnp.float32)
        hs = []                                              # register-resident per-step h
        for t in range(S):                                   # fully unrolled, static slices
            gi_t = gi[t * BP:(t + 1) * BP, :]                # (BP, 3H), sublane-tile aligned
            gh = jnp.dot(h, w_hh, preferred_element_type=jnp.float32)   # (BP, 3H)
            a = gi_t + gh                                    # one full-slab VPU add
            rz = jax.nn.sigmoid(a[:, :2 * H])                # single EUP push for r and z
            r = rz[:, :H]
            z = rz[:, H:]
            n = jnp.tanh(gi_t[:, 2 * H:] + r * (gh[:, 2 * H:] + b_hn))
            h = n + z * (h - n)                              # == (1-z)*n + z*h
            hs.append(h)

        layer_in = jnp.concatenate(hs, axis=0)               # (S*BP, H), stays in vregs

    # Output Linear + sigmoid over the whole sequence at once, single store.
    out = jnp.dot(layer_in, wout_ref[...],
                  preferred_element_type=jnp.float32) + bout_ref[...]
    o_ref[...] = jax.nn.sigmoid(out)


def _vmem_spec():
    # Whole array resident in VMEM (no grid, no tiling) — the entire problem is tiny.
    return pl.BlockSpec(memory_space=pltpu.MemorySpace.VMEM)


# ------------------------------- wrapper -----------------------------------
@jax.jit
def basic_gru_forward(x_bsd, torch_params):
    """x_bsd: (batch, seq, input_dim), batch_first like PyTorch."""
    gru_params, (w_out, b_out) = torch_params
    H = HIDDEN_DIM

    # ---- fuse PyTorch-layout weights into kernel layout (gate order [r, z, n]) ----
    wih0 = gru_params[0][0].T                                             # (D, 3H)
    wihr = jnp.stack([gru_params[l][0].T for l in range(1, NUM_LAYERS)])  # (L-1, H, 3H)
    whh = jnp.stack([gru_params[l][1].T for l in range(NUM_LAYERS)])      # (L, H, 3H)
    bi = jnp.stack([
        jnp.concatenate([
            gru_params[l][2][0:H] + gru_params[l][3][0:H],          # r: b_ir + b_hr
            gru_params[l][2][H:2 * H] + gru_params[l][3][H:2 * H],  # z: b_iz + b_hz
            gru_params[l][2][2 * H:],                               # n: b_in only
        ])[None, :]
        for l in range(NUM_LAYERS)])                                      # (L, 1, 3H)
    bhn = jnp.stack([gru_params[l][3][2 * H:][None, :]
                     for l in range(NUM_LAYERS)])                         # (L, 1, H)
    wout = w_out.T                                                        # (H, OUT)
    bout = b_out[None, :]                                                 # (1, OUT)

    B, S, D = x_bsd.shape
    # Time-major and batch-padded to B_PAD so every per-timestep slab is (8, ·).
    x_tbd = jnp.transpose(x_bsd, (1, 0, 2))                               # (S, B, D)
    x_pad = jnp.zeros((S, B_PAD, D), jnp.float32).at[:, :B, :].set(x_tbd)
    x_flat = x_pad.reshape(S * B_PAD, D)                                  # (S*BP, D)

    out_flat = pl.pallas_call(
        gru_kernel,
        out_shape=jax.ShapeDtypeStruct((S * B_PAD, OUTPUT_DIM), jnp.float32),
        in_specs=[_vmem_spec()] * 8,
        out_specs=_vmem_spec(),
    )(x_flat, wih0, wihr, whh, bi, bhn, wout, bout)

    out = out_flat.reshape(S, B_PAD, OUTPUT_DIM)[:, :B, :]                # drop pad rows
    return jnp.transpose(out, (1, 0, 2))                                  # (B, S, OUT)


# ------------------- deterministic PyTorch-layout parameters -------------------
def init_params(key):
    k = 1.0 / np.sqrt(HIDDEN_DIM)

    def uni(kk, shape):
        return jax.random.uniform(kk, shape, jnp.float32, -k, k)

    keys = jax.random.split(key, 4 * NUM_LAYERS + 2)
    gru_params = []
    idx = 0
    for layer in range(NUM_LAYERS):
        in_dim = INPUT_DIM if layer == 0 else HIDDEN_DIM
        w_ih = uni(keys[idx], (3 * HIDDEN_DIM, in_dim)); idx += 1   # [r; z; n] rows
        w_hh = uni(keys[idx], (3 * HIDDEN_DIM, HIDDEN_DIM)); idx += 1
        b_ih = uni(keys[idx], (3 * HIDDEN_DIM,)); idx += 1
        b_hh = uni(keys[idx], (3 * HIDDEN_DIM,)); idx += 1
        gru_params.append((w_ih, w_hh, b_ih, b_hh))
    w_out = uni(keys[idx], (OUTPUT_DIM, HIDDEN_DIM)); idx += 1
    b_out = uni(keys[idx], (OUTPUT_DIM,))
    return (tuple(gru_params), (w_out, b_out))


# ---------------------------- pure-JAX reference ----------------------------
def reference_forward(x_bsd, torch_params):
    """Direct transcription of PyTorch GRU (batch_first) + Linear + sigmoid."""
    gru_params, (w_out, b_out) = torch_params
    H = HIDDEN_DIM
    B, S, _ = x_bsd.shape
    layer_in = x_bsd
    for layer in range(NUM_LAYERS):
        w_ih, w_hh, b_ih, b_hh = gru_params[layer]
        h = jnp.zeros((B, H), jnp.float32)
        outs = []
        for t in range(S):
            xt = layer_in[:, t, :]
            gi = xt @ w_ih.T + b_ih
            gh = h @ w_hh.T + b_hh
            r = jax.nn.sigmoid(gi[:, 0:H] + gh[:, 0:H])
            z = jax.nn.sigmoid(gi[:, H:2 * H] + gh[:, H:2 * H])
            n = jnp.tanh(gi[:, 2 * H:] + r * gh[:, 2 * H:])
            h = (1.0 - z) * n + z * h
            outs.append(h)
        layer_in = jnp.stack(outs, axis=1)
    return jax.nn.sigmoid(layer_in @ w_out.T + b_out)


# ----------------------------------- main -----------------------------------
if __name__ == "__main__":
    key = jax.random.PRNGKey(0)
    pkey, xkey = jax.random.split(key)
    params = init_params(pkey)
    x = jax.random.normal(xkey, (BATCH, SEQ, INPUT_DIM), jnp.float32)

    out = basic_gru_forward(x, params)
    out = jax.block_until_ready(out)

    ref = reference_forward(x, params)
    np.testing.assert_allclose(np.asarray(out), np.asarray(ref), atol=1e-5, rtol=1e-5)

    print("KERNEL_OK")
</pallas_src>

<mosaic_0001>
module attributes {stable_mosaic.version = 11 : i64} {
  func.func @gru_kernel(%arg0: memref<64x4xf32, #tpu.memory_space<vmem>>, %arg1: memref<4x96xf32, #tpu.memory_space<vmem>>, %arg2: memref<2x32x96xf32, #tpu.memory_space<vmem>>, %arg3: memref<3x32x96xf32, #tpu.memory_space<vmem>>, %arg4: memref<3x1x96xf32, #tpu.memory_space<vmem>>, %arg5: memref<3x1x32xf32, #tpu.memory_space<vmem>>, %arg6: memref<32x4xf32, #tpu.memory_space<vmem>>, %arg7: memref<1x4xf32, #tpu.memory_space<vmem>>, %arg8: memref<64x4xf32, #tpu.memory_space<vmem>>) attributes {dimension_semantics = [], scalar_prefetch = 0 : i64, scratch_operands = 0 : i64, tpu.core_type = #tpu.core_type<tc>} {
    %c0 = arith.constant 0 : index
    %c0_0 = arith.constant 0 : index
    %0 = vector.load %arg0[%c0, %c0_0] : memref<64x4xf32, #tpu.memory_space<vmem>>, vector<64x4xf32>
    %c0_1 = arith.constant 0 : index
    %c0_2 = arith.constant 0 : index
    %1 = vector.load %arg1[%c0_1, %c0_2] : memref<4x96xf32, #tpu.memory_space<vmem>>, vector<4x96xf32>
    %c0_3 = arith.constant 0 : index
    %c0_4 = arith.constant 0 : index
    %c0_5 = arith.constant 0 : index
    %2 = vector.load %arg3[%c0_3, %c0_4, %c0_5] : memref<3x32x96xf32, #tpu.memory_space<vmem>>, vector<1x32x96xf32>
    %3 = vector.shape_cast %2 : vector<1x32x96xf32> to vector<32x96xf32>
    %c0_6 = arith.constant 0 : index
    %c0_7 = arith.constant 0 : index
    %c0_8 = arith.constant 0 : index
    %4 = vector.load %arg4[%c0_6, %c0_7, %c0_8] : memref<3x1x96xf32, #tpu.memory_space<vmem>>, vector<1x1x96xf32>
    %5 = vector.shape_cast %4 : vector<1x1x96xf32> to vector<1x96xf32>
    %c0_9 = arith.constant 0 : index
    %c0_10 = arith.constant 0 : index
    %c0_11 = arith.constant 0 : index
    %6 = vector.load %arg5[%c0_9, %c0_10, %c0_11] : memref<3x1x32xf32, #tpu.memory_space<vmem>>, vector<1x1x32xf32>
    %7 = vector.shape_cast %6 : vector<1x1x32xf32> to vector<1x32xf32>
    %8 = vector.shape_cast %7 : vector<1x32xf32> to vector<1x32xf32>
    %9 = vector.broadcast %8 : vector<1x32xf32> to vector<8x32xf32>
    %cst = arith.constant dense<0.000000e+00> : vector<64x96xf32>
    %10 = tpu.matmul %0, %1, %cst {dimension_numbers = #tpu.dot_dimension_numbers<[1], [0], [0], [1], [0, 0, 1, 1], [], []>} : vector<64x4xf32>, vector<4x96xf32>, vector<64x96xf32> -> vector<64x96xf32>
    %11 = vector.broadcast %5 : vector<1x96xf32> to vector<64x96xf32>
    %12 = arith.addf %10, %11 : vector<64x96xf32>
    %cst_12 = arith.constant 0.000000e+00 : f32
    %13 = vector.broadcast %cst_12 : f32 to vector<8x32xf32>
    %14 = vector.extract_strided_slice %12 {offsets = [0, 0], sizes = [8, 96], strides = [1, 1]} : vector<64x96xf32> to vector<8x96xf32>
    %cst_13 = arith.constant dense<0.000000e+00> : vector<8x96xf32>
    %15 = tpu.matmul %13, %3, %cst_13 {dimension_numbers = #tpu.dot_dimension_numbers<[1], [0], [0], [1], [0, 0, 1, 1], [], []>} : vector<8x32xf32>, vector<32x96xf32>, vector<8x96xf32> -> vector<8x96xf32>
    %16 = arith.addf %14, %15 : vector<8x96xf32>
    %17 = vector.extract_strided_slice %16 {offsets = [0, 0], sizes = [8, 64], strides = [1, 1]} : vector<8x96xf32> to vector<8x64xf32>
    %18 = arith.negf %17 : vector<8x64xf32>
    %19 = math.exp %18 : vector<8x64xf32>
    %cst_14 = arith.constant 1.000000e+00 : f32
    %20 = vector.broadcast %cst_14 : f32 to vector<8x64xf32>
    %21 = arith.addf %20, %19 : vector<8x64xf32>
    %22 = arith.divf %20, %21 : vector<8x64xf32>
    %23 = vector.extract_strided_slice %22 {offsets = [0, 0], sizes = [8, 32], strides = [1, 1]} : vector<8x64xf32> to vector<8x32xf32>
    %24 = vector.extract_strided_slice %22 {offsets = [0, 32], sizes = [8, 32], strides = [1, 1]} : vector<8x64xf32> to vector<8x32xf32>
    %25 = vector.extract_strided_slice %14 {offsets = [0, 64], sizes = [8, 32], strides = [1, 1]} : vector<8x96xf32> to vector<8x32xf32>
    %26 = vector.extract_strided_slice %15 {offsets = [0, 64], sizes = [8, 32], strides = [1, 1]} : vector<8x96xf32> to vector<8x32xf32>
    %27 = arith.addf %26, %9 : vector<8x32xf32>
    %28 = arith.mulf %23, %27 : vector<8x32xf32>
    %29 = arith.addf %25, %28 : vector<8x32xf32>
    %30 = math.tanh %29 : vector<8x32xf32>
    %31 = arith.subf %13, %30 : vector<8x32xf32>
    %32 = arith.mulf %24, %31 : vector<8x32xf32>
    %33 = arith.addf %30, %32 : vector<8x32xf32>
    %34 = vector.extract_strided_slice %12 {offsets = [8, 0], sizes = [8, 96], strides = [1, 1]} : vector<64x96xf32> to vector<8x96xf32>
    %cst_15 = arith.constant dense<0.000000e+00> : vector<8x96xf32>
    %35 = tpu.matmul %33, %3, %cst_15 {dimension_numbers = #tpu.dot_dimension_numbers<[1], [0], [0], [1], [0, 0, 1, 1], [], []>} : vector<8x32xf32>, vector<32x96xf32>, vector<8x96xf32> -> vector<8x96xf32>
    %36 = arith.addf %34, %35 : vector<8x96xf32>
    %37 = vector.extract_strided_slice %36 {offsets = [0, 0], sizes = [8, 64], strides = [1, 1]} : vector<8x96xf32> to vector<8x64xf32>
    %38 = arith.negf %37 : vector<8x64xf32>
    %39 = math.exp %38 : vector<8x64xf32>
    %cst_16 = arith.constant 1.000000e+00 : f32
    %40 = vector.broadcast %cst_16 : f32 to vector<8x64xf32>
    %41 = arith.addf %40, %39 : vector<8x64xf32>
    %42 = arith.divf %40, %41 : vector<8x64xf32>
    %43 = vector.extract_strided_slice %42 {offsets = [0, 0], sizes = [8, 32], strides = [1, 1]} : vector<8x64xf32> to vector<8x32xf32>
    %44 = vector.extract_strided_slice %42 {offsets = [0, 32], sizes = [8, 32], strides = [1, 1]} : vector<8x64xf32> to vector<8x32xf32>
    %45 = vector.extract_strided_slice %34 {offsets = [0, 64], sizes = [8, 32], strides = [1, 1]} : vector<8x96xf32> to vector<8x32xf32>
    %46 = vector.extract_strided_slice %35 {offsets = [0, 64], sizes = [8, 32], strides = [1, 1]} : vector<8x96xf32> to vector<8x32xf32>
    %47 = arith.addf %46, %9 : vector<8x32xf32>
    %48 = arith.mulf %43, %47 : vector<8x32xf32>
    %49 = arith.addf %45, %48 : vector<8x32xf32>
    %50 = math.tanh %49 : vector<8x32xf32>
    %51 = arith.subf %33, %50 : vector<8x32xf32>
    %52 = arith.mulf %44, %51 : vector<8x32xf32>
    %53 = arith.addf %50, %52 : vector<8x32xf32>
    %54 = vector.extract_strided_slice %12 {offsets = [16, 0], sizes = [8, 96], strides = [1, 1]} : vector<64x96xf32> to vector<8x96xf32>
    %cst_17 = arith.constant dense<0.000000e+00> : vector<8x96xf32>
    %55 = tpu.matmul %53, %3, %cst_17 {dimension_numbers = #tpu.dot_dimension_numbers<[1], [0], [0], [1], [0, 0, 1, 1], [], []>} : vector<8x32xf32>, vector<32x96xf32>, vector<8x96xf32> -> vector<8x96xf32>
    %56 = arith.addf %54, %55 : vector<8x96xf32>
    %57 = vector.extract_strided_slice %56 {offsets = [0, 0], sizes = [8, 64], strides = [1, 1]} : vector<8x96xf32> to vector<8x64xf32>
    %58 = arith.negf %57 : vector<8x64xf32>
    %59 = math.exp %58 : vector<8x64xf32>
    %cst_18 = arith.constant 1.000000e+00 : f32
    %60 = vector.broadcast %cst_18 : f32 to vector<8x64xf32>
    %61 = arith.addf %60, %59 : vector<8x64xf32>
    %62 = arith.divf %60, %61 : vector<8x64xf32>
    %63 = vector.extract_strided_slice %62 {offsets = [0, 0], sizes = [8, 32], strides = [1, 1]} : vector<8x64xf32> to vector<8x32xf32>
    %64 = vector.extract_strided_slice %62 {offsets = [0, 32], sizes = [8, 32], strides = [1, 1]} : vector<8x64xf32> to vector<8x32xf32>
    %65 = vector.extract_strided_slice %54 {offsets = [0, 64], sizes = [8, 32], strides = [1, 1]} : vector<8x96xf32> to vector<8x32xf32>
    %66 = vector.extract_strided_slice %55 {offsets = [0, 64], sizes = [8, 32], strides = [1, 1]} : vector<8x96xf32> to vector<8x32xf32>
    %67 = arith.addf %66, %9 : vector<8x32xf32>
    %68 = arith.mulf %63, %67 : vector<8x32xf32>
    %69 = arith.addf %65, %68 : vector<8x32xf32>
    %70 = math.tanh %69 : vector<8x32xf32>
    %71 = arith.subf %53, %70 : vector<8x32xf32>
    %72 = arith.mulf %64, %71 : vector<8x32xf32>
    %73 = arith.addf %70, %72 : vector<8x32xf32>
    %74 = vector.extract_strided_slice %12 {offsets = [24, 0], sizes = [8, 96], strides = [1, 1]} : vector<64x96xf32> to vector<8x96xf32>
    %cst_19 = arith.constant dense<0.000000e+00> : vector<8x96xf32>
    %75 = tpu.matmul %73, %3, %cst_19 {dimension_numbers = #tpu.dot_dimension_numbers<[1], [0], [0], [1], [0, 0, 1, 1], [], []>} : vector<8x32xf32>, vector<32x96xf32>, vector<8x96xf32> -> vector<8x96xf32>
    %76 = arith.addf %74, %75 : vector<8x96xf32>
    %77 = vector.extract_strided_slice %76 {offsets = [0, 0], sizes = [8, 64], strides = [1, 1]} : vector<8x96xf32> to vector<8x64xf32>
    %78 = arith.negf %77 : vector<8x64xf32>
    %79 = math.exp %78 : vector<8x64xf32>
    %cst_20 = arith.constant 1.000000e+00 : f32
    %80 = vector.broadcast %cst_20 : f32 to vector<8x64xf32>
    %81 = arith.addf %80, %79 : vector<8x64xf32>
    %82 = arith.divf %80, %81 : vector<8x64xf32>
    %83 = vector.extract_strided_slice %82 {offsets = [0, 0], sizes = [8, 32], strides = [1, 1]} : vector<8x64xf32> to vector<8x32xf32>
    %84 = vector.extract_strided_slice %82 {offsets = [0, 32], sizes = [8, 32], strides = [1, 1]} : vector<8x64xf32> to vector<8x32xf32>
    %85 = vector.extract_strided_slice %74 {offsets = [0, 64], sizes = [8, 32], strides = [1, 1]} : vector<8x96xf32> to vector<8x32xf32>
    %86 = vector.extract_strided_slice %75 {offsets = [0, 64], sizes = [8, 32], strides = [1, 1]} : vector<8x96xf32> to vector<8x32xf32>
    %87 = arith.addf %86, %9 : vector<8x32xf32>
    %88 = arith.mulf %83, %87 : vector<8x32xf32>
    %89 = arith.addf %85, %88 : vector<8x32xf32>
    %90 = math.tanh %89 : vector<8x32xf32>
    %91 = arith.subf %73, %90 : vector<8x32xf32>
    %92 = arith.mulf %84, %91 : vector<8x32xf32>
    %93 = arith.addf %90, %92 : vector<8x32xf32>
    %94 = vector.extract_strided_slice %12 {offsets = [32, 0], sizes = [8, 96], strides = [1, 1]} : vector<64x96xf32> to vector<8x96xf32>
    %cst_21 = arith.constant dense<0.000000e+00> : vector<8x96xf32>
    %95 = tpu.matmul %93, %3, %cst_21 {dimension_numbers = #tpu.dot_dimension_numbers<[1], [0], [0], [1], [0, 0, 1, 1], [], []>} : vector<8x32xf32>, vector<32x96xf32>, vector<8x96xf32> -> vector<8x96xf32>
    %96 = arith.addf %94, %95 : vector<8x96xf32>
    %97 = vector.extract_strided_slice %96 {offsets = [0, 0], sizes = [8, 64], strides = [1, 1]} : vector<8x96xf32> to vector<8x64xf32>
    %98 = arith.negf %97 : vector<8x64xf32>
    %99 = math.exp %98 : vector<8x64xf32>
    %cst_22 = arith.constant 1.000000e+00 : f32
    %100 = vector.broadcast %cst_22 : f32 to vector<8x64xf32>
    %101 = arith.addf %100, %99 : vector<8x64xf32>
    %102 = arith.divf %100, %101 : vector<8x64xf32>
    %103 = vector.extract_strided_slice %102 {offsets = [0, 0], sizes = [8, 32], strides = [1, 1]} : vector<8x64xf32> to vector<8x32xf32>
    %104 = vector.extract_strided_slice %102 {offsets = [0, 32], sizes = [8, 32], strides = [1, 1]} : vector<8x64xf32> to vector<8x32xf32>
    %105 = vector.extract_strided_slice %94 {offsets = [0, 64], sizes = [8, 32], strides = [1, 1]} : vector<8x96xf32> to vector<8x32xf32>
    %106 = vector.extract_strided_slice %95 {offsets = [0, 64], sizes = [8, 32], strides = [1, 1]} : vector<8x96xf32> to vector<8x32xf32>
    %107 = arith.addf %106, %9 : vector<8x32xf32>
    %108 = arith.mulf %103, %107 : vector<8x32xf32>
    %109 = arith.addf %105, %108 : vector<8x32xf32>
    %110 = math.tanh %109 : vector<8x32xf32>
    %111 = arith.subf %93, %110 : vector<8x32xf32>
    %112 = arith.mulf %104, %111 : vector<8x32xf32>
    %113 = arith.addf %110, %112 : vector<8x32xf32>
    %114 = vector.extract_strided_slice %12 {offsets = [40, 0], sizes = [8, 96], strides = [1, 1]} : vector<64x96xf32> to vector<8x96xf32>
    %cst_23 = arith.constant dense<0.000000e+00> : vector<8x96xf32>
    %115 = tpu.matmul %113, %3, %cst_23 {dimension_numbers = #tpu.dot_dimension_numbers<[1], [0], [0], [1], [0, 0, 1, 1], [], []>} : vector<8x32xf32>, vector<32x96xf32>, vector<8x96xf32> -> vector<8x96xf32>
    %116 = arith.addf %114, %115 : vector<8x96xf32>
    %117 = vector.extract_strided_slice %116 {offsets = [0, 0], sizes = [8, 64], strides = [1, 1]} : vector<8x96xf32> to vector<8x64xf32>
    %118 = arith.negf %117 : vector<8x64xf32>
    %119 = math.exp %118 : vector<8x64xf32>
    %cst_24 = arith.constant 1.000000e+00 : f32
    %120 = vector.broadcast %cst_24 : f32 to vector<8x64xf32>
    %121 = arith.addf %120, %119 : vector<8x64xf32>
    %122 = arith.divf %120, %121 : vector<8x64xf32>
    %123 = vector.extract_strided_slice %122 {offsets = [0, 0], sizes = [8, 32], strides = [1, 1]} : vector<8x64xf32> to vector<8x32xf32>
    %124 = vector.extract_strided_slice %122 {offsets = [0, 32], sizes = [8, 32], strides = [1, 1]} : vector<8x64xf32> to vector<8x32xf32>
    %125 = vector.extract_strided_slice %114 {offsets = [0, 64], sizes = [8, 32], strides = [1, 1]} : vector<8x96xf32> to vector<8x32xf32>
    %126 = vector.extract_strided_slice %115 {offsets = [0, 64], sizes = [8, 32], strides = [1, 1]} : vector<8x96xf32> to vector<8x32xf32>
    %127 = arith.addf %126, %9 : vector<8x32xf32>
    %128 = arith.mulf %123, %127 : vector<8x32xf32>
    %129 = arith.addf %125, %128 : vector<8x32xf32>
    %130 = math.tanh %129 : vector<8x32xf32>
    %131 = arith.subf %113, %130 : vector<8x32xf32>
    %132 = arith.mulf %124, %131 : vector<8x32xf32>
    %133 = arith.addf %130, %132 : vector<8x32xf32>
    %134 = vector.extract_strided_slice %12 {offsets = [48, 0], sizes = [8, 96], strides = [1, 1]} : vector<64x96xf32> to vector<8x96xf32>
    %cst_25 = arith.constant dense<0.000000e+00> : vector<8x96xf32>
    %135 = tpu.matmul %133, %3, %cst_25 {dimension_numbers = #tpu.dot_dimension_numbers<[1], [0], [0], [1], [0, 0, 1, 1], [], []>} : vector<8x32xf32>, vector<32x96xf32>, vector<8x96xf32> -> vector<8x96xf32>
    %136 = arith.addf %134, %135 : vector<8x96xf32>
    %137 = vector.extract_strided_slice %136 {offsets = [0, 0], sizes = [8, 64], strides = [1, 1]} : vector<8x96xf32> to vector<8x64xf32>
    %138 = arith.negf %137 : vector<8x64xf32>
    %139 = math.exp %138 : vector<8x64xf32>
    %cst_26 = arith.constant 1.000000e+00 : f32
    %140 = vector.broadcast %cst_26 : f32 to vector<8x64xf32>
    %141 = arith.addf %140, %139 : vector<8x64xf32>
    %142 = arith.divf %140, %141 : vector<8x64xf32>
    %143 = vector.extract_strided_slice %142 {offsets = [0, 0], sizes = [8, 32], strides = [1, 1]} : vector<8x64xf32> to vector<8x32xf32>
    %144 = vector.extract_strided_slice %142 {offsets = [0, 32], sizes = [8, 32], strides = [1, 1]} : vector<8x64xf32> to vector<8x32xf32>
    %145 = vector.extract_strided_slice %134 {offsets = [0, 64], sizes = [8, 32], strides = [1, 1]} : vector<8x96xf32> to vector<8x32xf32>
    %146 = vector.extract_strided_slice %135 {offsets = [0, 64], sizes = [8, 32], strides = [1, 1]} : vector<8x96xf32> to vector<8x32xf32>
    %147 = arith.addf %146, %9 : vector<8x32xf32>
    %148 = arith.mulf %143, %147 : vector<8x32xf32>
    %149 = arith.addf %145, %148 : vector<8x32xf32>
    %150 = math.tanh %149 : vector<8x32xf32>
    %151 = arith.subf %133, %150 : vector<8x32xf32>
    %152 = arith.mulf %144, %151 : vector<8x32xf32>
    %153 = arith.addf %150, %152 : vector<8x32xf32>
    %154 = vector.extract_strided_slice %12 {offsets = [56, 0], sizes = [8, 96], strides = [1, 1]} : vector<64x96xf32> to vector<8x96xf32>
    %cst_27 = arith.constant dense<0.000000e+00> : vector<8x96xf32>
    %155 = tpu.matmul %153, %3, %cst_27 {dimension_numbers = #tpu.dot_dimension_numbers<[1], [0], [0], [1], [0, 0, 1, 1], [], []>} : vector<8x32xf32>, vector<32x96xf32>, vector<8x96xf32> -> vector<8x96xf32>
    %156 = arith.addf %154, %155 : vector<8x96xf32>
    %157 = vector.extract_strided_slice %156 {offsets = [0, 0], sizes = [8, 64], strides = [1, 1]} : vector<8x96xf32> to vector<8x64xf32>
    %158 = arith.negf %157 : vector<8x64xf32>
    %159 = math.exp %158 : vector<8x64xf32>
    %cst_28 = arith.constant 1.000000e+00 : f32
    %160 = vector.broadcast %cst_28 : f32 to vector<8x64xf32>
    %161 = arith.addf %160, %159 : vector<8x64xf32>
    %162 = arith.divf %160, %161 : vector<8x64xf32>
    %163 = vector.extract_strided_slice %162 {offsets = [0, 0], sizes = [8, 32], strides = [1, 1]} : vector<8x64xf32> to vector<8x32xf32>
    %164 = vector.extract_strided_slice %162 {offsets = [0, 32], sizes = [8, 32], strides = [1, 1]} : vector<8x64xf32> to vector<8x32xf32>
    %165 = vector.extract_strided_slice %154 {offsets = [0, 64], sizes = [8, 32], strides = [1, 1]} : vector<8x96xf32> to vector<8x32xf32>
    %166 = vector.extract_strided_slice %155 {offsets = [0, 64], sizes = [8, 32], strides = [1, 1]} : vector<8x96xf32> to vector<8x32xf32>
    %167 = arith.addf %166, %9 : vector<8x32xf32>
    %168 = arith.mulf %163, %167 : vector<8x32xf32>
    %169 = arith.addf %165, %168 : vector<8x32xf32>
    %170 = math.tanh %169 : vector<8x32xf32>
    %171 = arith.subf %153, %170 : vector<8x32xf32>
    %172 = arith.mulf %164, %171 : vector<8x32xf32>
    %173 = arith.addf %170, %172 : vector<8x32xf32>
    %174 = tpu.concatenate %33, %53, %73, %93, %113, %133, %153, %173 in 0 : vector<8x32xf32>, vector<8x32xf32>, vector<8x32xf32>, vector<8x32xf32>, vector<8x32xf32>, vector<8x32xf32>, vector<8x32xf32>, vector<8x32xf32> -> vector<64x32xf32>
    %c0_29 = arith.constant 0 : index
    %c0_30 = arith.constant 0 : index
    %c0_31 = arith.constant 0 : index
    %175 = vector.load %arg2[%c0_29, %c0_30, %c0_31] : memref<2x32x96xf32, #tpu.memory_space<vmem>>, vector<1x32x96xf32>
    %176 = vector.shape_cast %175 : vector<1x32x96xf32> to vector<32x96xf32>
    %c1 = arith.constant 1 : index
    %c0_32 = arith.constant 0 : index
    %c0_33 = arith.constant 0 : index
    %177 = vector.load %arg3[%c1, %c0_32, %c0_33] : memref<3x32x96xf32, #tpu.memory_space<vmem>>, vector<1x32x96xf32>
    %178 = vector.shape_cast %177 : vector<1x32x96xf32> to vector<32x96xf32>
    %c1_34 = arith.constant 1 : index
    %c0_35 = arith.constant 0 : index
    %c0_36 = arith.constant 0 : index
    %179 = vector.load %arg4[%c1_34, %c0_35, %c0_36] : memref<3x1x96xf32, #tpu.memory_space<vmem>>, vector<1x1x96xf32>
    %180 = vector.shape_cast %179 : vector<1x1x96xf32> to vector<1x96xf32>
    %c1_37 = arith.constant 1 : index
    %c0_38 = arith.constant 0 : index
    %c0_39 = arith.constant 0 : index
    %181 = vector.load %arg5[%c1_37, %c0_38, %c0_39] : memref<3x1x32xf32, #tpu.memory_space<vmem>>, vector<1x1x32xf32>
    %182 = vector.shape_cast %181 : vector<1x1x32xf32> to vector<1x32xf32>
    %183 = vector.shape_cast %182 : vector<1x32xf32> to vector<1x32xf32>
    %184 = vector.broadcast %183 : vector<1x32xf32> to vector<8x32xf32>
    %cst_40 = arith.constant dense<0.000000e+00> : vector<64x96xf32>
    %185 = tpu.matmul %174, %176, %cst_40 {dimension_numbers = #tpu.dot_dimension_numbers<[1], [0], [0], [1], [0, 0, 1, 1], [], []>} : vector<64x32xf32>, vector<32x96xf32>, vector<64x96xf32> -> vector<64x96xf32>
    %186 = vector.broadcast %180 : vector<1x96xf32> to vector<64x96xf32>
    %187 = arith.addf %185, %186 : vector<64x96xf32>
    %cst_41 = arith.constant 0.000000e+00 : f32
    %188 = vector.broadcast %cst_41 : f32 to vector<8x32xf32>
    %189 = vector.extract_strided_slice %187 {offsets = [0, 0], sizes = [8, 96], strides = [1, 1]} : vector<64x96xf32> to vector<8x96xf32>
    %cst_42 = arith.constant dense<0.000000e+00> : vector<8x96xf32>
    %190 = tpu.matmul %188, %178, %cst_42 {dimension_numbers = #tpu.dot_dimension_numbers<[1], [0], [0], [1], [0, 0, 1, 1], [], []>} : vector<8x32xf32>, vector<32x96xf32>, vector<8x96xf32> -> vector<8x96xf32>
    %191 = arith.addf %189, %190 : vector<8x96xf32>
    %192 = vector.extract_strided_slice %191 {offsets = [0, 0], sizes = [8, 64], strides = [1, 1]} : vector<8x96xf32> to vector<8x64xf32>
    %193 = arith.negf %192 : vector<8x64xf32>
    %194 = math.exp %193 : vector<8x64xf32>
    %cst_43 = arith.constant 1.000000e+00 : f32
    %195 = vector.broadcast %cst_43 : f32 to vector<8x64xf32>
    %196 = arith.addf %195, %194 : vector<8x64xf32>
    %197 = arith.divf %195, %196 : vector<8x64xf32>
    %198 = vector.extract_strided_slice %197 {offsets = [0, 0], sizes = [8, 32], strides = [1, 1]} : vector<8x64xf32> to vector<8x32xf32>
    %199 = vector.extract_strided_slice %197 {offsets = [0, 32], sizes = [8, 32], strides = [1, 1]} : vector<8x64xf32> to vector<8x32xf32>
    %200 = vector.extract_strided_slice %189 {offsets = [0, 64], sizes = [8, 32], strides = [1, 1]} : vector<8x96xf32> to vector<8x32xf32>
    %201 = vector.extract_strided_slice %190 {offsets = [0, 64], sizes = [8, 32], strides = [1, 1]} : vector<8x96xf32> to vector<8x32xf32>
    %202 = arith.addf %201, %184 : vector<8x32xf32>
    %203 = arith.mulf %198, %202 : vector<8x32xf32>
    %204 = arith.addf %200, %203 : vector<8x32xf32>
    %205 = math.tanh %204 : vector<8x32xf32>
    %206 = arith.subf %188, %205 : vector<8x32xf32>
    %207 = arith.mulf %199, %206 : vector<8x32xf32>
    %208 = arith.addf %205, %207 : vector<8x32xf32>
    %209 = vector.extract_strided_slice %187 {offsets = [8, 0], sizes = [8, 96], strides = [1, 1]} : vector<64x96xf32> to vector<8x96xf32>
    %cst_44 = arith.constant dense<0.000000e+00> : vector<8x96xf32>
    %210 = tpu.matmul %208, %178, %cst_44 {dimension_numbers = #tpu.dot_dimension_numbers<[1], [0], [0], [1], [0, 0, 1, 1], [], []>} : vector<8x32xf32>, vector<32x96xf32>, vector<8x96xf32> -> vector<8x96xf32>
    %211 = arith.addf %209, %210 : vector<8x96xf32>
    %212 = vector.extract_strided_slice %211 {offsets = [0, 0], sizes = [8, 64], strides = [1, 1]} : vector<8x96xf32> to vector<8x64xf32>
    %213 = arith.negf %212 : vector<8x64xf32>
    %214 = math.exp %213 : vector<8x64xf32>
    %cst_45 = arith.constant 1.000000e+00 : f32
    %215 = vector.broadcast %cst_45 : f32 to vector<8x64xf32>
    %216 = arith.addf %215, %214 : vector<8x64xf32>
    %217 = arith.divf %215, %216 : vector<8x64xf32>
    %218 = vector.extract_strided_slice %217 {offsets = [0, 0], sizes = [8, 32], strides = [1, 1]} : vector<8x64xf32> to vector<8x32xf32>
    %219 = vector.extract_strided_slice %217 {offsets = [0, 32], sizes = [8, 32], strides = [1, 1]} : vector<8x64xf32> to vector<8x32xf32>
    %220 = vector.extract_strided_slice %209 {offsets = [0, 64], sizes = [8, 32], strides = [1, 1]} : vector<8x96xf32> to vector<8x32xf32>
    %221 = vector.extract_strided_slice %210 {offsets = [0, 64], sizes = [8, 32], strides = [1, 1]} : vector<8x96xf32> to vector<8x32xf32>
    %222 = arith.addf %221, %184 : vector<8x32xf32>
    %223 = arith.mulf %218, %222 : vector<8x32xf32>
    %224 = arith.addf %220, %223 : vector<8x32xf32>
    %225 = math.tanh %224 : vector<8x32xf32>
    %226 = arith.subf %208, %225 : vector<8x32xf32>
    %227 = arith.mulf %219, %226 : vector<8x32xf32>
    %228 = arith.addf %225, %227 : vector<8x32xf32>
    %229 = vector.extract_strided_slice %187 {offsets = [16, 0], sizes = [8, 96], strides = [1, 1]} : vector<64x96xf32> to vector<8x96xf32>
    %cst_46 = arith.constant dense<0.000000e+00> : vector<8x96xf32>
    %230 = tpu.matmul %228, %178, %cst_46 {dimension_numbers = #tpu.dot_dimension_numbers<[1], [0], [0], [1], [0, 0, 1, 1], [], []>} : vector<8x32xf32>, vector<32x96xf32>, vector<8x96xf32> -> vector<8x96xf32>
    %231 = arith.addf %229, %230 : vector<8x96xf32>
    %232 = vector.extract_strided_slice %231 {offsets = [0, 0], sizes = [8, 64], strides = [1, 1]} : vector<8x96xf32> to vector<8x64xf32>
    %233 = arith.negf %232 : vector<8x64xf32>
    %234 = math.exp %233 : vector<8x64xf32>
    %cst_47 = arith.constant 1.000000e+00 : f32
    %235 = vector.broadcast %cst_47 : f32 to vector<8x64xf32>
    %236 = arith.addf %235, %234 : vector<8x64xf32>
    %237 = arith.divf %235, %236 : vector<8x64xf32>
    %238 = vector.extract_strided_slice %237 {offsets = [0, 0], sizes = [8, 32], strides = [1, 1]} : vector<8x64xf32> to vector<8x32xf32>
    %239 = vector.extract_strided_slice %237 {offsets = [0, 32], sizes = [8, 32], strides = [1, 1]} : vector<8x64xf32> to vector<8x32xf32>
    %240 = vector.extract_strided_slice %229 {offsets = [0, 64], sizes = [8, 32], strides = [1, 1]} : vector<8x96xf32> to vector<8x32xf32>
    %241 = vector.extract_strided_slice %230 {offsets = [0, 64], sizes = [8, 32], strides = [1, 1]} : vector<8x96xf32> to vector<8x32xf32>
    %242 = arith.addf %241, %184 : vector<8x32xf32>
    %243 = arith.mulf %238, %242 : vector<8x32xf32>
    %244 = arith.addf %240, %243 : vector<8x32xf32>
    %245 = math.tanh %244 : vector<8x32xf32>
    %246 = arith.subf %228, %245 : vector<8x32xf32>
    %247 = arith.mulf %239, %246 : vector<8x32xf32>
    %248 = arith.addf %245, %247 : vector<8x32xf32>
    %249 = vector.extract_strided_slice %187 {offsets = [24, 0], sizes = [8, 96], strides = [1, 1]} : vector<64x96xf32> to vector<8x96xf32>
    %cst_48 = arith.constant dense<0.000000e+00> : vector<8x96xf32>
    %250 = tpu.matmul %248, %178, %cst_48 {dimension_numbers = #tpu.dot_dimension_numbers<[1], [0], [0], [1], [0, 0, 1, 1], [], []>} : vector<8x32xf32>, vector<32x96xf32>, vector<8x96xf32> -> vector<8x96xf32>
    %251 = arith.addf %249, %250 : vector<8x96xf32>
    %252 = vector.extract_strided_slice %251 {offsets = [0, 0], sizes = [8, 64], strides = [1, 1]} : vector<8x96xf32> to vector<8x64xf32>
    %253 = arith.negf %252 : vector<8x64xf32>
    %254 = math.exp %253 : vector<8x64xf32>
    %cst_49 = arith.constant 1.000000e+00 : f32
    %255 = vector.broadcast %cst_49 : f32 to vector<8x64xf32>
    %256 = arith.addf %255, %254 : vector<8x64xf32>
    %257 = arith.divf %255, %256 : vector<8x64xf32>
    %258 = vector.extract_strided_slice %257 {offsets = [0, 0], sizes = [8, 32], strides = [1, 1]} : vector<8x64xf32> to vector<8x32xf32>
    %259 = vector.extract_strided_slice %257 {offsets = [0, 32], sizes = [8, 32], strides = [1, 1]} : vector<8x64xf32> to vector<8x32xf32>
    %260 = vector.extract_strided_slice %249 {offsets = [0, 64], sizes = [8, 32], strides = [1, 1]} : vector<8x96xf32> to vector<8x32xf32>
    %261 = vector.extract_strided_slice %250 {offsets = [0, 64], sizes = [8, 32], strides = [1, 1]} : vector<8x96xf32> to vector<8x32xf32>
    %262 = arith.addf %261, %184 : vector<8x32xf32>
    %263 = arith.mulf %258, %262 : vector<8x32xf32>
    %264 = arith.addf %260, %263 : vector<8x32xf32>
    %265 = math.tanh %264 : vector<8x32xf32>
    %266 = arith.subf %248, %265 : vector<8x32xf32>
    %267 = arith.mulf %259, %266 : vector<8x32xf32>
    %268 = arith.addf %265, %267 : vector<8x32xf32>
    %269 = vector.extract_strided_slice %187 {offsets = [32, 0], sizes = [8, 96], strides = [1, 1]} : vector<64x96xf32> to vector<8x96xf32>
    %cst_50 = arith.constant dense<0.000000e+00> : vector<8x96xf32>
    %270 = tpu.matmul %268, %178, %cst_50 {dimension_numbers = #tpu.dot_dimension_numbers<[1], [0], [0], [1], [0, 0, 1, 1], [], []>} : vector<8x32xf32>, vector<32x96xf32>, vector<8x96xf32> -> vector<8x96xf32>
    %271 = arith.addf %269, %270 : vector<8x96xf32>
    %272 = vector.extract_strided_slice %271 {offsets = [0, 0], sizes = [8, 64], strides = [1, 1]} : vector<8x96xf32> to vector<8x64xf32>
    %273 = arith.negf %272 : vector<8x64xf32>
    %274 = math.exp %273 : vector<8x64xf32>
    %cst_51 = arith.constant 1.000000e+00 : f32
    %275 = vector.broadcast %cst_51 : f32 to vector<8x64xf32>
    %276 = arith.addf %275, %274 : vector<8x64xf32>
    %277 = arith.divf %275, %276 : vector<8x64xf32>
    %278 = vector.extract_strided_slice %277 {offsets = [0, 0], sizes = [8, 32], strides = [1, 1]} : vector<8x64xf32> to vector<8x32xf32>
    %279 = vector.extract_strided_slice %277 {offsets = [0, 32], sizes = [8, 32], strides = [1, 1]} : vector<8x64xf32> to vector<8x32xf32>
    %280 = vector.extract_strided_slice %269 {offsets = [0, 64], sizes = [8, 32], strides = [1, 1]} : vector<8x96xf32> to vector<8x32xf32>
    %281 = vector.extract_strided_slice %270 {offsets = [0, 64], sizes = [8, 32], strides = [1, 1]} : vector<8x96xf32> to vector<8x32xf32>
    %282 = arith.addf %281, %184 : vector<8x32xf32>
    %283 = arith.mulf %278, %282 : vector<8x32xf32>
    %284 = arith.addf %280, %283 : vector<8x32xf32>
    %285 = math.tanh %284 : vector<8x32xf32>
    %286 = arith.subf %268, %285 : vector<8x32xf32>
    %287 = arith.mulf %279, %286 : vector<8x32xf32>
    %288 = arith.addf %285, %287 : vector<8x32xf32>
    %289 = vector.extract_strided_slice %187 {offsets = [40, 0], sizes = [8, 96], strides = [1, 1]} : vector<64x96xf32> to vector<8x96xf32>
    %cst_52 = arith.constant dense<0.000000e+00> : vector<8x96xf32>
    %290 = tpu.matmul %288, %178, %cst_52 {dimension_numbers = #tpu.dot_dimension_numbers<[1], [0], [0], [1], [0, 0, 1, 1], [], []>} : vector<8x32xf32>, vector<32x96xf32>, vector<8x96xf32> -> vector<8x96xf32>
    %291 = arith.addf %289, %290 : vector<8x96xf32>
    %292 = vector.extract_strided_slice %291 {offsets = [0, 0], sizes = [8, 64], strides = [1, 1]} : vector<8x96xf32> to vector<8x64xf32>
    %293 = arith.negf %292 : vector<8x64xf32>
    %294 = math.exp %293 : vector<8x64xf32>
    %cst_53 = arith.constant 1.000000e+00 : f32
    %295 = vector.broadcast %cst_53 : f32 to vector<8x64xf32>
    %296 = arith.addf %295, %294 : vector<8x64xf32>
    %297 = arith.divf %295, %296 : vector<8x64xf32>
    %298 = vector.extract_strided_slice %297 {offsets = [0, 0], sizes = [8, 32], strides = [1, 1]} : vector<8x64xf32> to vector<8x32xf32>
    %299 = vector.extract_strided_slice %297 {offsets = [0, 32], sizes = [8, 32], strides = [1, 1]} : vector<8x64xf32> to vector<8x32xf32>
    %300 = vector.extract_strided_slice %289 {offsets = [0, 64], sizes = [8, 32], strides = [1, 1]} : vector<8x96xf32> to vector<8x32xf32>
    %301 = vector.extract_strided_slice %290 {offsets = [0, 64], sizes = [8, 32], strides = [1, 1]} : vector<8x96xf32> to vector<8x32xf32>
    %302 = arith.addf %301, %184 : vector<8x32xf32>
    %303 = arith.mulf %298, %302 : vector<8x32xf32>
    %304 = arith.addf %300, %303 : vector<8x32xf32>
    %305 = math.tanh %304 : vector<8x32xf32>
    %306 = arith.subf %288, %305 : vector<8x32xf32>
    %307 = arith.mulf %299, %306 : vector<8x32xf32>
    %308 = arith.addf %305, %307 : vector<8x32xf32>
    %309 = vector.extract_strided_slice %187 {offsets = [48, 0], sizes = [8, 96], strides = [1, 1]} : vector<64x96xf32> to vector<8x96xf32>
    %cst_54 = arith.constant dense<0.000000e+00> : vector<8x96xf32>
    %310 = tpu.matmul %308, %178, %cst_54 {dimension_numbers = #tpu.dot_dimension_numbers<[1], [0], [0], [1], [0, 0, 1, 1], [], []>} : vector<8x32xf32>, vector<32x96xf32>, vector<8x96xf32> -> vector<8x96xf32>
    %311 = arith.addf %309, %310 : vector<8x96xf32>
    %312 = vector.extract_strided_slice %311 {offsets = [0, 0], sizes = [8, 64], strides = [1, 1]} : vector<8x96xf32> to vector<8x64xf32>
    %313 = arith.negf %312 : vector<8x64xf32>
    %314 = math.exp %313 : vector<8x64xf32>
    %cst_55 = arith.constant 1.000000e+00 : f32
    %315 = vector.broadcast %cst_55 : f32 to vector<8x64xf32>
    %316 = arith.addf %315, %314 : vector<8x64xf32>
    %317 = arith.divf %315, %316 : vector<8x64xf32>
    %318 = vector.extract_strided_slice %317 {offsets = [0, 0], sizes = [8, 32], strides = [1, 1]} : vector<8x64xf32> to vector<8x32xf32>
    %319 = vector.extract_strided_slice %317 {offsets = [0, 32], sizes = [8, 32], strides = [1, 1]} : vector<8x64xf32> to vector<8x32xf32>
    %320 = vector.extract_strided_slice %309 {offsets = [0, 64], sizes = [8, 32], strides = [1, 1]} : vector<8x96xf32> to vector<8x32xf32>
    %321 = vector.extract_strided_slice %310 {offsets = [0, 64], sizes = [8, 32], strides = [1, 1]} : vector<8x96xf32> to vector<8x32xf32>
    %322 = arith.addf %321, %184 : vector<8x32xf32>
    %323 = arith.mulf %318, %322 : vector<8x32xf32>
    %324 = arith.addf %320, %323 : vector<8x32xf32>
    %325 = math.tanh %324 : vector<8x32xf32>
    %326 = arith.subf %308, %325 : vector<8x32xf32>
    %327 = arith.mulf %319, %326 : vector<8x32xf32>
    %328 = arith.addf %325, %327 : vector<8x32xf32>
    %329 = vector.extract_strided_slice %187 {offsets = [56, 0], sizes = [8, 96], strides = [1, 1]} : vector<64x96xf32> to vector<8x96xf32>
    %cst_56 = arith.constant dense<0.000000e+00> : vector<8x96xf32>
    %330 = tpu.matmul %328, %178, %cst_56 {dimension_numbers = #tpu.dot_dimension_numbers<[1], [0], [0], [1], [0, 0, 1, 1], [], []>} : vector<8x32xf32>, vector<32x96xf32>, vector<8x96xf32> -> vector<8x96xf32>
    %331 = arith.addf %329, %330 : vector<8x96xf32>
    %332 = vector.extract_strided_slice %331 {offsets = [0, 0], sizes = [8, 64], strides = [1, 1]} : vector<8x96xf32> to vector<8x64xf32>
    %333 = arith.negf %332 : vector<8x64xf32>
    %334 = math.exp %333 : vector<8x64xf32>
    %cst_57 = arith.constant 1.000000e+00 : f32
    %335 = vector.broadcast %cst_57 : f32 to vector<8x64xf32>
    %336 = arith.addf %335, %334 : vector<8x64xf32>
    %337 = arith.divf %335, %336 : vector<8x64xf32>
    %338 = vector.extract_strided_slice %337 {offsets = [0, 0], sizes = [8, 32], strides = [1, 1]} : vector<8x64xf32> to vector<8x32xf32>
    %339 = vector.extract_strided_slice %337 {offsets = [0, 32], sizes = [8, 32], strides = [1, 1]} : vector<8x64xf32> to vector<8x32xf32>
    %340 = vector.extract_strided_slice %329 {offsets = [0, 64], sizes = [8, 32], strides = [1, 1]} : vector<8x96xf32> to vector<8x32xf32>
    %341 = vector.extract_strided_slice %330 {offsets = [0, 64], sizes = [8, 32], strides = [1, 1]} : vector<8x96xf32> to vector<8x32xf32>
    %342 = arith.addf %341, %184 : vector<8x32xf32>
    %343 = arith.mulf %338, %342 : vector<8x32xf32>
    %344 = arith.addf %340, %343 : vector<8x32xf32>
    %345 = math.tanh %344 : vector<8x32xf32>
    %346 = arith.subf %328, %345 : vector<8x32xf32>
    %347 = arith.mulf %339, %346 : vector<8x32xf32>
    %348 = arith.addf %345, %347 : vector<8x32xf32>
    %349 = tpu.concatenate %208, %228, %248, %268, %288, %308, %328, %348 in 0 : vector<8x32xf32>, vector<8x32xf32>, vector<8x32xf32>, vector<8x32xf32>, vector<8x32xf32>, vector<8x32xf32>, vector<8x32xf32>, vector<8x32xf32> -> vector<64x32xf32>
    %c1_58 = arith.constant 1 : index
    %c0_59 = arith.constant 0 : index
    %c0_60 = arith.constant 0 : index
    %350 = vector.load %arg2[%c1_58, %c0_59, %c0_60] : memref<2x32x96xf32, #tpu.memory_space<vmem>>, vector<1x32x96xf32>
    %351 = vector.shape_cast %350 : vector<1x32x96xf32> to vector<32x96xf32>
    %c2 = arith.constant 2 : index
    %c0_61 = arith.constant 0 : index
    %c0_62 = arith.constant 0 : index
    %352 = vector.load %arg3[%c2, %c0_61, %c0_62] : memref<3x32x96xf32, #tpu.memory_space<vmem>>, vector<1x32x96xf32>
    %353 = vector.shape_cast %352 : vector<1x32x96xf32> to vector<32x96xf32>
    %c2_63 = arith.constant 2 : index
    %c0_64 = arith.constant 0 : index
    %c0_65 = arith.constant 0 : index
    %354 = vector.load %arg4[%c2_63, %c0_64, %c0_65] : memref<3x1x96xf32, #tpu.memory_space<vmem>>, vector<1x1x96xf32>
    %355 = vector.shape_cast %354 : vector<1x1x96xf32> to vector<1x96xf32>
    %c2_66 = arith.constant 2 : index
    %c0_67 = arith.constant 0 : index
    %c0_68 = arith.constant 0 : index
    %356 = vector.load %arg5[%c2_66, %c0_67, %c0_68] : memref<3x1x32xf32, #tpu.memory_space<vmem>>, vector<1x1x32xf32>
    %357 = vector.shape_cast %356 : vector<1x1x32xf32> to vector<1x32xf32>
    %358 = vector.shape_cast %357 : vector<1x32xf32> to vector<1x32xf32>
    %359 = vector.broadcast %358 : vector<1x32xf32> to vector<8x32xf32>
    %cst_69 = arith.constant dense<0.000000e+00> : vector<64x96xf32>
    %360 = tpu.matmul %349, %351, %cst_69 {dimension_numbers = #tpu.dot_dimension_numbers<[1], [0], [0], [1], [0, 0, 1, 1], [], []>} : vector<64x32xf32>, vector<32x96xf32>, vector<64x96xf32> -> vector<64x96xf32>
    %361 = vector.broadcast %355 : vector<1x96xf32> to vector<64x96xf32>
    %362 = arith.addf %360, %361 : vector<64x96xf32>
    %cst_70 = arith.constant 0.000000e+00 : f32
    %363 = vector.broadcast %cst_70 : f32 to vector<8x32xf32>
    %364 = vector.extract_strided_slice %362 {offsets = [0, 0], sizes = [8, 96], strides = [1, 1]} : vector<64x96xf32> to vector<8x96xf32>
    %cst_71 = arith.constant dense<0.000000e+00> : vector<8x96xf32>
    %365 = tpu.matmul %363, %353, %cst_71 {dimension_numbers = #tpu.dot_dimension_numbers<[1], [0], [0], [1], [0, 0, 1, 1], [], []>} : vector<8x32xf32>, vector<32x96xf32>, vector<8x96xf32> -> vector<8x96xf32>
    %366 = arith.addf %364, %365 : vector<8x96xf32>
    %367 = vector.extract_strided_slice %366 {offsets = [0, 0], sizes = [8, 64], strides = [1, 1]} : vector<8x96xf32> to vector<8x64xf32>
    %368 = arith.negf %367 : vector<8x64xf32>
    %369 = math.exp %368 : vector<8x64xf32>
    %cst_72 = arith.constant 1.000000e+00 : f32
    %370 = vector.broadcast %cst_72 : f32 to vector<8x64xf32>
    %371 = arith.addf %370, %369 : vector<8x64xf32>
    %372 = arith.divf %370, %371 : vector<8x64xf32>
    %373 = vector.extract_strided_slice %372 {offsets = [0, 0], sizes = [8, 32], strides = [1, 1]} : vector<8x64xf32> to vector<8x32xf32>
    %374 = vector.extract_strided_slice %372 {offsets = [0, 32], sizes = [8, 32], strides = [1, 1]} : vector<8x64xf32> to vector<8x32xf32>
    %375 = vector.extract_strided_slice %364 {offsets = [0, 64], sizes = [8, 32], strides = [1, 1]} : vector<8x96xf32> to vector<8x32xf32>
    %376 = vector.extract_strided_slice %365 {offsets = [0, 64], sizes = [8, 32], strides = [1, 1]} : vector<8x96xf32> to vector<8x32xf32>
    %377 = arith.addf %376, %359 : vector<8x32xf32>
    %378 = arith.mulf %373, %377 : vector<8x32xf32>
    %379 = arith.addf %375, %378 : vector<8x32xf32>
    %380 = math.tanh %379 : vector<8x32xf32>
    %381 = arith.subf %363, %380 : vector<8x32xf32>
    %382 = arith.mulf %374, %381 : vector<8x32xf32>
    %383 = arith.addf %380, %382 : vector<8x32xf32>
    %384 = vector.extract_strided_slice %362 {offsets = [8, 0], sizes = [8, 96], strides = [1, 1]} : vector<64x96xf32> to vector<8x96xf32>
    %cst_73 = arith.constant dense<0.000000e+00> : vector<8x96xf32>
    %385 = tpu.matmul %383, %353, %cst_73 {dimension_numbers = #tpu.dot_dimension_numbers<[1], [0], [0], [1], [0, 0, 1, 1], [], []>} : vector<8x32xf32>, vector<32x96xf32>, vector<8x96xf32> -> vector<8x96xf32>
    %386 = arith.addf %384, %385 : vector<8x96xf32>
    %387 = vector.extract_strided_slice %386 {offsets = [0, 0], sizes = [8, 64], strides = [1, 1]} : vector<8x96xf32> to vector<8x64xf32>
    %388 = arith.negf %387 : vector<8x64xf32>
    %389 = math.exp %388 : vector<8x64xf32>
    %cst_74 = arith.constant 1.000000e+00 : f32
    %390 = vector.broadcast %cst_74 : f32 to vector<8x64xf32>
    %391 = arith.addf %390, %389 : vector<8x64xf32>
    %392 = arith.divf %390, %391 : vector<8x64xf32>
    %393 = vector.extract_strided_slice %392 {offsets = [0, 0], sizes = [8, 32], strides = [1, 1]} : vector<8x64xf32> to vector<8x32xf32>
    %394 = vector.extract_strided_slice %392 {offsets = [0, 32], sizes = [8, 32], strides = [1, 1]} : vector<8x64xf32> to vector<8x32xf32>
    %395 = vector.extract_strided_slice %384 {offsets = [0, 64], sizes = [8, 32], strides = [1, 1]} : vector<8x96xf32> to vector<8x32xf32>
    %396 = vector.extract_strided_slice %385 {offsets = [0, 64], sizes = [8, 32], strides = [1, 1]} : vector<8x96xf32> to vector<8x32xf32>
    %397 = arith.addf %396, %359 : vector<8x32xf32>
    %398 = arith.mulf %393, %397 : vector<8x32xf32>
    %399 = arith.addf %395, %398 : vector<8x32xf32>
    %400 = math.tanh %399 : vector<8x32xf32>
    %401 = arith.subf %383, %400 : vector<8x32xf32>
    %402 = arith.mulf %394, %401 : vector<8x32xf32>
    %403 = arith.addf %400, %402 : vector<8x32xf32>
    %404 = vector.extract_strided_slice %362 {offsets = [16, 0], sizes = [8, 96], strides = [1, 1]} : vector<64x96xf32> to vector<8x96xf32>
    %cst_75 = arith.constant dense<0.000000e+00> : vector<8x96xf32>
    %405 = tpu.matmul %403, %353, %cst_75 {dimension_numbers = #tpu.dot_dimension_numbers<[1], [0], [0], [1], [0, 0, 1, 1], [], []>} : vector<8x32xf32>, vector<32x96xf32>, vector<8x96xf32> -> vector<8x96xf32>
    %406 = arith.addf %404, %405 : vector<8x96xf32>
    %407 = vector.extract_strided_slice %406 {offsets = [0, 0], sizes = [8, 64], strides = [1, 1]} : vector<8x96xf32> to vector<8x64xf32>
    %408 = arith.negf %407 : vector<8x64xf32>
    %409 = math.exp %408 : vector<8x64xf32>
    %cst_76 = arith.constant 1.000000e+00 : f32
    %410 = vector.broadcast %cst_76 : f32 to vector<8x64xf32>
    %411 = arith.addf %410, %409 : vector<8x64xf32>
    %412 = arith.divf %410, %411 : vector<8x64xf32>
    %413 = vector.extract_strided_slice %412 {offsets = [0, 0], sizes = [8, 32], strides = [1, 1]} : vector<8x64xf32> to vector<8x32xf32>
    %414 = vector.extract_strided_slice %412 {offsets = [0, 32], sizes = [8, 32], strides = [1, 1]} : vector<8x64xf32> to vector<8x32xf32>
    %415 = vector.extract_strided_slice %404 {offsets = [0, 64], sizes = [8, 32], strides = [1, 1]} : vector<8x96xf32> to vector<8x32xf32>
    %416 = vector.extract_strided_slice %405 {offsets = [0, 64], sizes = [8, 32], strides = [1, 1]} : vector<8x96xf32> to vector<8x32xf32>
    %417 = arith.addf %416, %359 : vector<8x32xf32>
    %418 = arith.mulf %413, %417 : vector<8x32xf32>
    %419 = arith.addf %415, %418 : vector<8x32xf32>
    %420 = math.tanh %419 : vector<8x32xf32>
    %421 = arith.subf %403, %420 : vector<8x32xf32>
    %422 = arith.mulf %414, %421 : vector<8x32xf32>
    %423 = arith.addf %420, %422 : vector<8x32xf32>
    %424 = vector.extract_strided_slice %362 {offsets = [24, 0], sizes = [8, 96], strides = [1, 1]} : vector<64x96xf32> to vector<8x96xf32>
    %cst_77 = arith.constant dense<0.000000e+00> : vector<8x96xf32>
    %425 = tpu.matmul %423, %353, %cst_77 {dimension_numbers = #tpu.dot_dimension_numbers<[1], [0], [0], [1], [0, 0, 1, 1], [], []>} : vector<8x32xf32>, vector<32x96xf32>, vector<8x96xf32> -> vector<8x96xf32>
    %426 = arith.addf %424, %425 : vector<8x96xf32>
    %427 = vector.extract_strided_slice %426 {offsets = [0, 0], sizes = [8, 64], strides = [1, 1]} : vector<8x96xf32> to vector<8x64xf32>
    %428 = arith.negf %427 : vector<8x64xf32>
    %429 = math.exp %428 : vector<8x64xf32>
    %cst_78 = arith.constant 1.000000e+00 : f32
    %430 = vector.broadcast %cst_78 : f32 to vector<8x64xf32>
    %431 = arith.addf %430, %429 : vector<8x64xf32>
    %432 = arith.divf %430, %431 : vector<8x64xf32>
    %433 = vector.extract_strided_slice %432 {offsets = [0, 0], sizes = [8, 32], strides = [1, 1]} : vector<8x64xf32> to vector<8x32xf32>
    %434 = vector.extract_strided_slice %432 {offsets = [0, 32], sizes = [8, 32], strides = [1, 1]} : vector<8x64xf32> to vector<8x32xf32>
    %435 = vector.extract_strided_slice %424 {offsets = [0, 64], sizes = [8, 32], strides = [1, 1]} : vector<8x96xf32> to vector<8x32xf32>
    %436 = vector.extract_strided_slice %425 {offsets = [0, 64], sizes = [8, 32], strides = [1, 1]} : vector<8x96xf32> to vector<8x32xf32>
    %437 = arith.addf %436, %359 : vector<8x32xf32>
    %438 = arith.mulf %433, %437 : vector<8x32xf32>
    %439 = arith.addf %435, %438 : vector<8x32xf32>
    %440 = math.tanh %439 : vector<8x32xf32>
    %441 = arith.subf %423, %440 : vector<8x32xf32>
    %442 = arith.mulf %434, %441 : vector<8x32xf32>
    %443 = arith.addf %440, %442 : vector<8x32xf32>
    %444 = vector.extract_strided_slice %362 {offsets = [32, 0], sizes = [8, 96], strides = [1, 1]} : vector<64x96xf32> to vector<8x96xf32>
    %cst_79 = arith.constant dense<0.000000e+00> : vector<8x96xf32>
    %445 = tpu.matmul %443, %353, %cst_79 {dimension_numbers = #tpu.dot_dimension_numbers<[1], [0], [0], [1], [0, 0, 1, 1], [], []>} : vector<8x32xf32>, vector<32x96xf32>, vector<8x96xf32> -> vector<8x96xf32>
    %446 = arith.addf %444, %445 : vector<8x96xf32>
    %447 = vector.extract_strided_slice %446 {offsets = [0, 0], sizes = [8, 64], strides = [1, 1]} : vector<8x96xf32> to vector<8x64xf32>
    %448 = arith.negf %447 : vector<8x64xf32>
    %449 = math.exp %448 : vector<8x64xf32>
    %cst_80 = arith.constant 1.000000e+00 : f32
    %450 = vector.broadcast %cst_80 : f32 to vector<8x64xf32>
    %451 = arith.addf %450, %449 : vector<8x64xf32>
    %452 = arith.divf %450, %451 : vector<8x64xf32>
    %453 = vector.extract_strided_slice %452 {offsets = [0, 0], sizes = [8, 32], strides = [1, 1]} : vector<8x64xf32> to vector<8x32xf32>
    %454 = vector.extract_strided_slice %452 {offsets = [0, 32], sizes = [8, 32], strides = [1, 1]} : vector<8x64xf32> to vector<8x32xf32>
    %455 = vector.extract_strided_slice %444 {offsets = [0, 64], sizes = [8, 32], strides = [1, 1]} : vector<8x96xf32> to vector<8x32xf32>
    %456 = vector.extract_strided_slice %445 {offsets = [0, 64], sizes = [8, 32], strides = [1, 1]} : vector<8x96xf32> to vector<8x32xf32>
    %457 = arith.addf %456, %359 : vector<8x32xf32>
    %458 = arith.mulf %453, %457 : vector<8x32xf32>
    %459 = arith.addf %455, %458 : vector<8x32xf32>
    %460 = math.tanh %459 : vector<8x32xf32>
    %461 = arith.subf %443, %460 : vector<8x32xf32>
    %462 = arith.mulf %454, %461 : vector<8x32xf32>
    %463 = arith.addf %460, %462 : vector<8x32xf32>
    %464 = vector.extract_strided_slice %362 {offsets = [40, 0], sizes = [8, 96], strides = [1, 1]} : vector<64x96xf32> to vector<8x96xf32>
    %cst_81 = arith.constant dense<0.000000e+00> : vector<8x96xf32>
    %465 = tpu.matmul %463, %353, %cst_81 {dimension_numbers = #tpu.dot_dimension_numbers<[1], [0], [0], [1], [0, 0, 1, 1], [], []>} : vector<8x32xf32>, vector<32x96xf32>, vector<8x96xf32> -> vector<8x96xf32>
    %466 = arith.addf %464, %465 : vector<8x96xf32>
    %467 = vector.extract_strided_slice %466 {offsets = [0, 0], sizes = [8, 64], strides = [1, 1]} : vector<8x96xf32> to vector<8x64xf32>
    %468 = arith.negf %467 : vector<8x64xf32>
    %469 = math.exp %468 : vector<8x64xf32>
    %cst_82 = arith.constant 1.000000e+00 : f32
    %470 = vector.broadcast %cst_82 : f32 to vector<8x64xf32>
    %471 = arith.addf %470, %469 : vector<8x64xf32>
    %472 = arith.divf %470, %471 : vector<8x64xf32>
    %473 = vector.extract_strided_slice %472 {offsets = [0, 0], sizes = [8, 32], strides = [1, 1]} : vector<8x64xf32> to vector<8x32xf32>
    %474 = vector.extract_strided_slice %472 {offsets = [0, 32], sizes = [8, 32], strides = [1, 1]} : vector<8x64xf32> to vector<8x32xf32>
    %475 = vector.extract_strided_slice %464 {offsets = [0, 64], sizes = [8, 32], strides = [1, 1]} : vector<8x96xf32> to vector<8x32xf32>
    %476 = vector.extract_strided_slice %465 {offsets = [0, 64], sizes = [8, 32], strides = [1, 1]} : vector<8x96xf32> to vector<8x32xf32>
    %477 = arith.addf %476, %359 : vector<8x32xf32>
    %478 = arith.mulf %473, %477 : vector<8x32xf32>
    %479 = arith.addf %475, %478 : vector<8x32xf32>
    %480 = math.tanh %479 : vector<8x32xf32>
    %481 = arith.subf %463, %480 : vector<8x32xf32>
    %482 = arith.mulf %474, %481 : vector<8x32xf32>
    %483 = arith.addf %480, %482 : vector<8x32xf32>
    %484 = vector.extract_strided_slice %362 {offsets = [48, 0], sizes = [8, 96], strides = [1, 1]} : vector<64x96xf32> to vector<8x96xf32>
    %cst_83 = arith.constant dense<0.000000e+00> : vector<8x96xf32>
    %485 = tpu.matmul %483, %353, %cst_83 {dimension_numbers = #tpu.dot_dimension_numbers<[1], [0], [0], [1], [0, 0, 1, 1], [], []>} : vector<8x32xf32>, vector<32x96xf32>, vector<8x96xf32> -> vector<8x96xf32>
    %486 = arith.addf %484, %485 : vector<8x96xf32>
    %487 = vector.extract_strided_slice %486 {offsets = [0, 0], sizes = [8, 64], strides = [1, 1]} : vector<8x96xf32> to vector<8x64xf32>
    %488 = arith.negf %487 : vector<8x64xf32>
    %489 = math.exp %488 : vector<8x64xf32>
    %cst_84 = arith.constant 1.000000e+00 : f32
    %490 = vector.broadcast %cst_84 : f32 to vector<8x64xf32>
    %491 = arith.addf %490, %489 : vector<8x64xf32>
    %492 = arith.divf %490, %491 : vector<8x64xf32>
    %493 = vector.extract_strided_slice %492 {offsets = [0, 0], sizes = [8, 32], strides = [1, 1]} : vector<8x64xf32> to vector<8x32xf32>
    %494 = vector.extract_strided_slice %492 {offsets = [0, 32], sizes = [8, 32], strides = [1, 1]} : vector<8x64xf32> to vector<8x32xf32>
    %495 = vector.extract_strided_slice %484 {offsets = [0, 64], sizes = [8, 32], strides = [1, 1]} : vector<8x96xf32> to vector<8x32xf32>
    %496 = vector.extract_strided_slice %485 {offsets = [0, 64], sizes = [8, 32], strides = [1, 1]} : vector<8x96xf32> to vector<8x32xf32>
    %497 = arith.addf %496, %359 : vector<8x32xf32>
    %498 = arith.mulf %493, %497 : vector<8x32xf32>
    %499 = arith.addf %495, %498 : vector<8x32xf32>
    %500 = math.tanh %499 : vector<8x32xf32>
    %501 = arith.subf %483, %500 : vector<8x32xf32>
    %502 = arith.mulf %494, %501 : vector<8x32xf32>
    %503 = arith.addf %500, %502 : vector<8x32xf32>
    %504 = vector.extract_strided_slice %362 {offsets = [56, 0], sizes = [8, 96], strides = [1, 1]} : vector<64x96xf32> to vector<8x96xf32>
    %cst_85 = arith.constant dense<0.000000e+00> : vector<8x96xf32>
    %505 = tpu.matmul %503, %353, %cst_85 {dimension_numbers = #tpu.dot_dimension_numbers<[1], [0], [0], [1], [0, 0, 1, 1], [], []>} : vector<8x32xf32>, vector<32x96xf32>, vector<8x96xf32> -> vector<8x96xf32>
    %506 = arith.addf %504, %505 : vector<8x96xf32>
    %507 = vector.extract_strided_slice %506 {offsets = [0, 0], sizes = [8, 64], strides = [1, 1]} : vector<8x96xf32> to vector<8x64xf32>
    %508 = arith.negf %507 : vector<8x64xf32>
    %509 = math.exp %508 : vector<8x64xf32>
    %cst_86 = arith.constant 1.000000e+00 : f32
    %510 = vector.broadcast %cst_86 : f32 to vector<8x64xf32>
    %511 = arith.addf %510, %509 : vector<8x64xf32>
    %512 = arith.divf %510, %511 : vector<8x64xf32>
    %513 = vector.extract_strided_slice %512 {offsets = [0, 0], sizes = [8, 32], strides = [1, 1]} : vector<8x64xf32> to vector<8x32xf32>
    %514 = vector.extract_strided_slice %512 {offsets = [0, 32], sizes = [8, 32], strides = [1, 1]} : vector<8x64xf32> to vector<8x32xf32>
    %515 = vector.extract_strided_slice %504 {offsets = [0, 64], sizes = [8, 32], strides = [1, 1]} : vector<8x96xf32> to vector<8x32xf32>
    %516 = vector.extract_strided_slice %505 {offsets = [0, 64], sizes = [8, 32], strides = [1, 1]} : vector<8x96xf32> to vector<8x32xf32>
    %517 = arith.addf %516, %359 : vector<8x32xf32>
    %518 = arith.mulf %513, %517 : vector<8x32xf32>
    %519 = arith.addf %515, %518 : vector<8x32xf32>
    %520 = math.tanh %519 : vector<8x32xf32>
    %521 = arith.subf %503, %520 : vector<8x32xf32>
    %522 = arith.mulf %514, %521 : vector<8x32xf32>
    %523 = arith.addf %520, %522 : vector<8x32xf32>
    %524 = tpu.concatenate %383, %403, %423, %443, %463, %483, %503, %523 in 0 : vector<8x32xf32>, vector<8x32xf32>, vector<8x32xf32>, vector<8x32xf32>, vector<8x32xf32>, vector<8x32xf32>, vector<8x32xf32>, vector<8x32xf32> -> vector<64x32xf32>
    %c0_87 = arith.constant 0 : index
    %c0_88 = arith.constant 0 : index
    %525 = vector.load %arg6[%c0_87, %c0_88] : memref<32x4xf32, #tpu.memory_space<vmem>>, vector<32x4xf32>
    %cst_89 = arith.constant dense<0.000000e+00> : vector<64x4xf32>
    %526 = tpu.matmul %524, %525, %cst_89 {dimension_numbers = #tpu.dot_dimension_numbers<[1], [0], [0], [1], [0, 0, 1, 1], [], []>} : vector<64x32xf32>, vector<32x4xf32>, vector<64x4xf32> -> vector<64x4xf32>
    %c0_90 = arith.constant 0 : index
    %c0_91 = arith.constant 0 : index
    %527 = vector.load %arg7[%c0_90, %c0_91] : memref<1x4xf32, #tpu.memory_space<vmem>>, vector<1x4xf32>
    %528 = vector.broadcast %527 : vector<1x4xf32> to vector<64x4xf32>
    %529 = arith.addf %526, %528 : vector<64x4xf32>
    %530 = arith.negf %529 : vector<64x4xf32>
    %531 = math.exp %530 : vector<64x4xf32>
    %cst_92 = arith.constant 1.000000e+00 : f32
    %532 = vector.broadcast %cst_92 : f32 to vector<64x4xf32>
    %533 = arith.addf %532, %531 : vector<64x4xf32>
    %534 = arith.divf %532, %533 : vector<64x4xf32>
    %c0_93 = arith.constant 0 : index
    %c0_94 = arith.constant 0 : index
    %535 = vector.load %arg8[%c0_93, %c0_94] : memref<64x4xf32, #tpu.memory_space<vmem>>, vector<64x4xf32>
    tpu.vector_store %arg8[%c0_93, %c0_94], %534 {strides = array<i32>} : memref<64x4xf32, #tpu.memory_space<vmem>>, vector<64x4xf32>,
    return
  }
}

</mosaic_0001>

<llo_original>
// kernel: basic_gru_forward.1
$region0: #{basic_gru_forward.1}
  #allocation0 [shape = 'u32[]', space=smem, size = 0x4, offset = 0x4, fixed_abs, tag = 'smem constant byte address 0x4 - core index']
  #allocation1 [shape = 'u32[72,128]{1,0:T(1,128)}', space=vmem, size = 0x9000, scoped, tag = 'internal scratch']
  %s0 = inlined_call_operand.vmem [shape: f32[64,4], index: 0, kind: input, shape index: {}]
  %s1 = inlined_call_operand.vmem [shape: f32[4,96], index: 1, kind: input, shape index: {}]
  %s2 = inlined_call_operand.vmem [shape: f32[2,32,96], index: 2, kind: input, shape index: {}]
  %s3 = inlined_call_operand.vmem [shape: f32[3,32,96], index: 3, kind: input, shape index: {}]
  %s4 = inlined_call_operand.vmem [shape: f32[3,1,96], index: 4, kind: input, shape index: {}]
  %s5 = inlined_call_operand.vmem [shape: f32[3,1,32], index: 5, kind: input, shape index: {}]
  %s6 = inlined_call_operand.vmem [shape: f32[32,4], index: 6, kind: input, shape index: {}]
  %s7 = inlined_call_operand.vmem [shape: f32[1,4], index: 7, kind: input, shape index: {}]
  %s8 = inlined_call_operand.vmem [shape: f32[64,4], index: 8, kind: output, shape index: {}]
  %s9 = sld [smem:[#allocation0]]
  $region42: #{basic_gru_forward.1} parent=0
    _
  %s11 = ssub.s32 1, %s9
  %s12 = scalar_select 0, %s11, %s9
  // Predicated region
  $region2: #{basic_gru_forward.1} parent=0 // pred_check
    _
  $region3: #{basic_gru_forward.1} parent=0 // pred_check_branch
    %14 = sbr.rel (0) target = $region5
  $region4: #{basic_gru_forward.1} parent=0 // pred_region
    _
  $region5: #{basic_gru_forward.1} parent=0 // pred_fallthru
    _
  // Predicated region
  $region6: #{basic_gru_forward.1} parent=0 // pred_check
    _
  $region7: #{basic_gru_forward.1} parent=0 // pred_check_branch
    %16 = sbr.rel (0) target = $region9
  $region8: #{basic_gru_forward.1} parent=0 // pred_region
    _
  $region9: #{basic_gru_forward.1} parent=0 // pred_fallthru
    _
  // Predicated region
  $region10: #{basic_gru_forward.1} parent=0 // pred_check
    _
  $region11: #{basic_gru_forward.1} parent=0 // pred_check_branch
    %18 = sbr.rel (0) target = $region13
  $region12: #{basic_gru_forward.1} parent=0 // pred_region
    _
  $region13: #{basic_gru_forward.1} parent=0 // pred_fallthru
    _
  // Predicated region
  $region14: #{basic_gru_forward.1} parent=0 // pred_check
    _
  $region15: #{basic_gru_forward.1} parent=0 // pred_check_branch
    %20 = sbr.rel (0) target = $region17
  $region16: #{basic_gru_forward.1} parent=0 // pred_region
    _
  $region17: #{basic_gru_forward.1} parent=0 // pred_fallthru
    _
  // Predicated region
  $region18: #{basic_gru_forward.1} parent=0 // pred_check
    _
  $region19: #{basic_gru_forward.1} parent=0 // pred_check_branch
    %22 = sbr.rel (0) target = $region21
  $region20: #{basic_gru_forward.1} parent=0 // pred_region
    _
  $region21: #{basic_gru_forward.1} parent=0 // pred_fallthru
    _
  // Predicated region
  $region22: #{basic_gru_forward.1} parent=0 // pred_check
    _
  $region23: #{basic_gru_forward.1} parent=0 // pred_check_branch
    %24 = sbr.rel (0) target = $region25
  $region24: #{basic_gru_forward.1} parent=0 // pred_region
    _
  $region25: #{basic_gru_forward.1} parent=0 // pred_fallthru
    _
  // Predicated region
  $region26: #{basic_gru_forward.1} parent=0 // pred_check
    _
  $region27: #{basic_gru_forward.1} parent=0 // pred_check_branch
    %26 = sbr.rel (0) target = $region29
  $region28: #{basic_gru_forward.1} parent=0 // pred_region
    _
  $region29: #{basic_gru_forward.1} parent=0 // pred_fallthru
    _
  // Predicated region
  $region30: #{basic_gru_forward.1} parent=0 // pred_check
    _
  $region31: #{basic_gru_forward.1} parent=0 // pred_check_branch
    %28 = sbr.rel (0) target = $region33
  $region32: #{basic_gru_forward.1} parent=0 // pred_region
    _
  $region33: #{basic_gru_forward.1} parent=0 // pred_fallthru
    _
  %v29 = vld [vmem:[%s0] sm:$0xff]
  %v30 = vld [vmem:[%s0 + $0x8] sm:$0xff]
  %v31 = vld [vmem:[%s0 + $0x10] sm:$0xff]
  %v32 = vld [vmem:[%s0 + $0x18] sm:$0xff]
  %v33 = vld [vmem:[%s0 + $0x20] sm:$0xff]
  %v34 = vld [vmem:[%s0 + $0x28] sm:$0xff]
  %v35 = vld [vmem:[%s0 + $0x30] sm:$0xff]
  %v36 = vld [vmem:[%s0 + $0x38] sm:$0xff]
  %v37 = vld [vmem:[%s1] sm:$0xf]
  %v38 = vld [vmem:[%s3] sm:$0xff]
  %v39 = vld [vmem:[%s3 + $0x8] sm:$0xff]
  %v40 = vld [vmem:[%s3 + $0x10] sm:$0xff]
  %v41 = vld [vmem:[%s3 + $0x18] sm:$0xff]
  %v42 = vld [vmem:[%s4] sm:$0x1]
  %v43 = vld [vmem:[%s5] sm:$0x1]
  %v45 = vperm.slane %v43, 0
  %v47 = vperm.slane %v42, 0
  %vm49 = vcmask 31744
  %v51 = vsel %vm49, %v29, 0
  %v54 = vsel %vm49, %v30, 0
  %v57 = vsel %vm49, %v31, 0
  %v60 = vsel %vm49, %v32, 0
  %v63 = vsel %vm49, %v33, 0
  %v66 = vsel %vm49, %v34, 0
  %v69 = vsel %vm49, %v35, 0
  %v72 = vsel %vm49, %v36, 0
  %vm74 = vcmask 1043456
  %v76 = vsel %vm74, %v37, 0
  %78 = vmatpush.msra.mxu0 0.0
  %79 = vmatpush.msra.mxu0 0.0
  %80 = vmatpush.msra.mxu0 0.0
  %81 = vmatpush.msra.mxu0 0.0
  %82 = vmatpush.msra.mxu0 0.0
  %83 = vmatpush.msra.mxu0 0.0
  %84 = vmatpush.msra.mxu0 0.0
  %85 = vmatpush.msra.mxu0 0.0
  %86 = vmatpush.msra.mxu0 0.0
  %87 = vmatpush.msra.mxu0 0.0
  %88 = vmatpush.msra.mxu0 0.0
  %89 = vmatpush.msra.mxu0 0.0
  %90 = vmatpush.msra.mxu0 0.0
  %91 = vmatpush.msra.mxu0 0.0
  %92 = vmatpush.msra.mxu0 0.0
  %93 = vmatpush.msra.mxu0 %v76
  %94 = vmatmul.f32.gmra.mxu0 %v51
  %v95 = vpop.f32.mrf.mxu0
  %v96 = vadd.f32 %v47, %v95
  %97 = vmatmul.f32.gmra.mxu0 %v54
  %v98 = vpop.f32.mrf.mxu0
  %v99 = vadd.f32 %v47, %v98
  %100 = vmatmul.f32.gmra.mxu0 %v57
  %v101 = vpop.f32.mrf.mxu0
  %v102 = vadd.f32 %v47, %v101
  %103 = vmatmul.f32.gmra.mxu0 %v60
  %v104 = vpop.f32.mrf.mxu0
  %v105 = vadd.f32 %v47, %v104
  %106 = vmatmul.f32.gmra.mxu0 %v63
  %v107 = vpop.f32.mrf.mxu0
  %v108 = vadd.f32 %v47, %v107
  %109 = vmatmul.f32.gmra.mxu0 %v66
  %v110 = vpop.f32.mrf.mxu0
  %v111 = vadd.f32 %v47, %v110
  %112 = vmatmul.f32.gmra.mxu0 %v69
  %v113 = vpop.f32.mrf.mxu0
  %v114 = vadd.f32 %v47, %v113
  %115 = vmatmul.f32.gmra.mxu0 %v72
  %v116 = vpop.f32.mrf.mxu0
  %v117 = vadd.f32 %v47, %v116
  %118 = vdwg.mxu0
  %vm119 = vcmask 261120
  %v121 = vsel %vm119, 0.0, 0
  %123 = vmatpush.msra.mxu0 0.0
  %124 = vmatpush.msra.mxu0 0.0
  %125 = vmatpush.msra.mxu0 0.0
  %126 = vmatpush.msra.mxu0 0.0
  %127 = vmatpush.msra.mxu0 0.0
  %128 = vmatpush.msra.mxu0 0.0
  %129 = vmatpush.msra.mxu0 0.0
  %130 = vmatpush.msra.mxu0 0.0
  %131 = vmatpush.msra.mxu0 0.0
  %132 = vmatpush.msra.mxu0 0.0
  %133 = vmatpush.msra.mxu0 0.0
  %134 = vmatpush.msra.mxu0 0.0
  %135 = vmatpush.msra.mxu0 %v41
  %136 = vmatpush.msra.mxu0 %v40
  %137 = vmatpush.msra.mxu0 %v39
  %138 = vmatpush.msra.mxu0 %v38
  %139 = vmatmul.f32.gmra.mxu0 %v121
  %v140 = vpop.f32.mrf.mxu0
  %v141 = vadd.f32 0.0, %v140
  %142 = vdwg.mxu0
  %v143 = vadd.f32 %v96, %v141
  %v144 = vxor.u32 %v143, 2147483648
  %v145 = vmul.f32 %v144, 1.442695
  %v146 = vpow.pop %v145
  %v147 = vadd.f32 %v146, 1.0
  %v148 = vrcp.pop %v147
  %v149 = vmul.f32 %v147, %v148
  %v150 = vsub.f32 1.0, %v149
  %v151 = vmul.f32 %v148, %v150
  %v152 = vadd.f32 %v148, %v151
  %vm153 = vweird.f32 %v147
  %vm154 = vweird.f32 %v148
  %vm155 = vmor %vm153, %vm154
  %v156 = vsel %vm155, %v148, %v152
  %v157 = vand.u32 2147483647, %v147
  %vm158 = vcmp.eq.f32.partialorder %v157, 8.507059e+37
  %v159 = vand.u32 %v147, 2147483648
  %v160 = vor.u32 1.1754944e-38, %v159
  %v161 = vsel %vm158, %v160, %v156
  %v162 = vmul.f32 1.0, %v161
  %163 = vrot.lane.b32.xlu0 %v45, 64
  %v164 = vpop.permute.xlu0 %163
  %v166 = vadd.f32 %v141, %v164
  %168 = vrot.lane.b32.xlu0 %v166, 64
  %v169 = vpop.permute.xlu0 %168
  %v171 = vmul.f32 %v162, %v169
  %173 = vrot.lane.b32.xlu0 %v171, 64
  %v174 = vpop.permute.xlu0 %173
  %v176 = vadd.f32 %v96, %v174
  %v177 = vtanh.pop %v176
  %v178 = vsub.f32 0.0, %v177
  %180 = vrot.lane.b32.xlu0 %v178, 96
  %v181 = vpop.permute.xlu0 %180
  %v183 = vmul.f32 %v162, %v181
  %185 = vrot.lane.b32.xlu0 %v183, 32
  %v186 = vpop.permute.xlu0 %185
  %v188 = vadd.f32 %v177, %v186
  %190 = vrot.lane.b32.xlu0 %v188, 64
  %v191 = vpop.permute.xlu0 %190
  %v192 = vsel %vm119, %v191, 0
  %194 = vmatpush.msra.mxu0 0.0
  %195 = vmatpush.msra.mxu0 0.0
  %196 = vmatpush.msra.mxu0 0.0
  %197 = vmatpush.msra.mxu0 0.0
  %198 = vmatpush.msra.mxu0 0.0
  %199 = vmatpush.msra.mxu0 0.0
  %200 = vmatpush.msra.mxu0 0.0
  %201 = vmatpush.msra.mxu0 0.0
  %202 = vmatpush.msra.mxu0 0.0
  %203 = vmatpush.msra.mxu0 0.0
  %204 = vmatpush.msra.mxu0 0.0
  %205 = vmatpush.msra.mxu0 0.0
  %206 = vmatpush.msra.mxu0 %v41
  %207 = vmatpush.msra.mxu0 %v40
  %208 = vmatpush.msra.mxu0 %v39
  %209 = vmatpush.msra.mxu0 %v38
  %210 = vmatmul.f32.gmra.mxu0 %v192
  %v211 = vpop.f32.mrf.mxu0
  %v212 = vadd.f32 0.0, %v211
  %213 = vdwg.mxu0
  %v214 = vadd.f32 %v99, %v212
  %v215 = vxor.u32 %v214, 2147483648
  %v216 = vmul.f32 %v215, 1.442695
  %v217 = vpow.pop %v216
  %v218 = vadd.f32 %v217, 1.0
  %v219 = vrcp.pop %v218
  %v220 = vmul.f32 %v218, %v219
  %v221 = vsub.f32 1.0, %v220
  %v222 = vmul.f32 %v219, %v221
  %v223 = vadd.f32 %v219, %v222
  %vm224 = vweird.f32 %v218
  %vm225 = vweird.f32 %v219
  %vm226 = vmor %vm224, %vm225
  %v227 = vsel %vm226, %v219, %v223
  %v228 = vand.u32 2147483647, %v218
  %vm229 = vcmp.eq.f32.partialorder %v228, 8.507059e+37
  %v230 = vand.u32 %v218, 2147483648
  %v231 = vor.u32 1.1754944e-38, %v230
  %v232 = vsel %vm229, %v231, %v227
  %v233 = vmul.f32 1.0, %v232
  %v234 = vadd.f32 %v212, %v164
  %236 = vrot.lane.b32.xlu0 %v234, 64
  %v237 = vpop.permute.xlu0 %236
  %v239 = vmul.f32 %v233, %v237
  %241 = vrot.lane.b32.xlu0 %v239, 64
  %v242 = vpop.permute.xlu0 %241
  %v244 = vadd.f32 %v99, %v242
  %v245 = vtanh.pop %v244
  %v246 = vsub.f32 %v188, %v245
  %248 = vrot.lane.b32.xlu0 %v246, 96
  %v249 = vpop.permute.xlu0 %248
  %v251 = vmul.f32 %v233, %v249
  %253 = vrot.lane.b32.xlu0 %v251, 32
  %v254 = vpop.permute.xlu0 %253
  %v256 = vadd.f32 %v245, %v254
  %258 = vrot.lane.b32.xlu0 %v256, 64
  %v259 = vpop.permute.xlu0 %258
  %v260 = vsel %vm119, %v259, 0
  %262 = vmatpush.msra.mxu0 0.0
  %263 = vmatpush.msra.mxu0 0.0
  %264 = vmatpush.msra.mxu0 0.0
  %265 = vmatpush.msra.mxu0 0.0
  %266 = vmatpush.msra.mxu0 0.0
  %267 = vmatpush.msra.mxu0 0.0
  %268 = vmatpush.msra.mxu0 0.0
  %269 = vmatpush.msra.mxu0 0.0
  %270 = vmatpush.msra.mxu0 0.0
  %271 = vmatpush.msra.mxu0 0.0
  %272 = vmatpush.msra.mxu0 0.0
  %273 = vmatpush.msra.mxu0 0.0
  %274 = vmatpush.msra.mxu0 %v41
  %275 = vmatpush.msra.mxu0 %v40
  %276 = vmatpush.msra.mxu0 %v39
  %277 = vmatpush.msra.mxu0 %v38
  %278 = vmatmul.f32.gmra.mxu0 %v260
  %v279 = vpop.f32.mrf.mxu0
  %v280 = vadd.f32 0.0, %v279
  %281 = vdwg.mxu0
  %v282 = vadd.f32 %v102, %v280
  %v283 = vxor.u32 %v282, 2147483648
  %v284 = vmul.f32 %v283, 1.442695
  %v285 = vpow.pop %v284
  %v286 = vadd.f32 %v285, 1.0
  %v287 = vrcp.pop %v286
  %v288 = vmul.f32 %v286, %v287
  %v289 = vsub.f32 1.0, %v288
  %v290 = vmul.f32 %v287, %v289
  %v291 = vadd.f32 %v287, %v290
  %vm292 = vweird.f32 %v286
  %vm293 = vweird.f32 %v287
  %vm294 = vmor %vm292, %vm293
  %v295 = vsel %vm294, %v287, %v291
  %v296 = vand.u32 2147483647, %v286
  %vm297 = vcmp.eq.f32.partialorder %v296, 8.507059e+37
  %v298 = vand.u32 %v286, 2147483648
  %v299 = vor.u32 1.1754944e-38, %v298
  %v300 = vsel %vm297, %v299, %v295
  %v301 = vmul.f32 1.0, %v300
  %v302 = vadd.f32 %v280, %v164
  %304 = vrot.lane.b32.xlu0 %v302, 64
  %v305 = vpop.permute.xlu0 %304
  %v307 = vmul.f32 %v301, %v305
  %309 = vrot.lane.b32.xlu0 %v307, 64
  %v310 = vpop.permute.xlu0 %309
  %v312 = vadd.f32 %v102, %v310
  %v313 = vtanh.pop %v312
  %v314 = vsub.f32 %v256, %v313
  %316 = vrot.lane.b32.xlu0 %v314, 96
  %v317 = vpop.permute.xlu0 %316
  %v319 = vmul.f32 %v301, %v317
  %321 = vrot.lane.b32.xlu0 %v319, 32
  %v322 = vpop.permute.xlu0 %321
  %v324 = vadd.f32 %v313, %v322
  %326 = vrot.lane.b32.xlu0 %v324, 64
  %v327 = vpop.permute.xlu0 %326
  %v328 = vsel %vm119, %v327, 0
  %330 = vmatpush.msra.mxu0 0.0
  %331 = vmatpush.msra.mxu0 0.0
  %332 = vmatpush.msra.mxu0 0.0
  %333 = vmatpush.msra.mxu0 0.0
  %334 = vmatpush.msra.mxu0 0.0
  %335 = vmatpush.msra.mxu0 0.0
  %336 = vmatpush.msra.mxu0 0.0
  %337 = vmatpush.msra.mxu0 0.0
  %338 = vmatpush.msra.mxu0 0.0
  %339 = vmatpush.msra.mxu0 0.0
  %340 = vmatpush.msra.mxu0 0.0
  %341 = vmatpush.msra.mxu0 0.0
  %342 = vmatpush.msra.mxu0 %v41
  %343 = vmatpush.msra.mxu0 %v40
  %344 = vmatpush.msra.mxu0 %v39
  %345 = vmatpush.msra.mxu0 %v38
  %346 = vmatmul.f32.gmra.mxu0 %v328
  %v347 = vpop.f32.mrf.mxu0
  %v348 = vadd.f32 0.0, %v347
  %349 = vdwg.mxu0
  %v350 = vadd.f32 %v105, %v348
  %v351 = vxor.u32 %v350, 2147483648
  %v352 = vmul.f32 %v351, 1.442695
  %v353 = vpow.pop %v352
  %v354 = vadd.f32 %v353, 1.0
  %v355 = vrcp.pop %v354
  %v356 = vmul.f32 %v354, %v355
  %v357 = vsub.f32 1.0, %v356
  %v358 = vmul.f32 %v355, %v357
  %v359 = vadd.f32 %v355, %v358
  %vm360 = vweird.f32 %v354
  %vm361 = vweird.f32 %v355
  %vm362 = vmor %vm360, %vm361
  %v363 = vsel %vm362, %v355, %v359
  %v364 = vand.u32 2147483647, %v354
  %vm365 = vcmp.eq.f32.partialorder %v364, 8.507059e+37
  %v366 = vand.u32 %v354, 2147483648
  %v367 = vor.u32 1.1754944e-38, %v366
  %v368 = vsel %vm365, %v367, %v363
  %v369 = vmul.f32 1.0, %v368
  %v370 = vadd.f32 %v348, %v164
  %372 = vrot.lane.b32.xlu0 %v370, 64
  %v373 = vpop.permute.xlu0 %372
  %v375 = vmul.f32 %v369, %v373
  %377 = vrot.lane.b32.xlu0 %v375, 64
  %v378 = vpop.permute.xlu0 %377
  %v380 = vadd.f32 %v105, %v378
  %v381 = vtanh.pop %v380
  %v382 = vsub.f32 %v324, %v381
  %384 = vrot.lane.b32.xlu0 %v382, 96
  %v385 = vpop.permute.xlu0 %384
  %v387 = vmul.f32 %v369, %v385
  %389 = vrot.lane.b32.xlu0 %v387, 32
  %v390 = vpop.permute.xlu0 %389
  %v392 = vadd.f32 %v381, %v390
  %394 = vrot.lane.b32.xlu0 %v392, 64
  %v395 = vpop.permute.xlu0 %394
  %v396 = vsel %vm119, %v395, 0
  %398 = vmatpush.msra.mxu0 0.0
  %399 = vmatpush.msra.mxu0 0.0
  %400 = vmatpush.msra.mxu0 0.0
  %401 = vmatpush.msra.mxu0 0.0
  %402 = vmatpush.msra.mxu0 0.0
  %403 = vmatpush.msra.mxu0 0.0
  %404 = vmatpush.msra.mxu0 0.0
  %405 = vmatpush.msra.mxu0 0.0
  %406 = vmatpush.msra.mxu0 0.0
  %407 = vmatpush.msra.mxu0 0.0
  %408 = vmatpush.msra.mxu0 0.0
  %409 = vmatpush.msra.mxu0 0.0
  %410 = vmatpush.msra.mxu0 %v41
  %411 = vmatpush.msra.mxu0 %v40
  %412 = vmatpush.msra.mxu0 %v39
  %413 = vmatpush.msra.mxu0 %v38
  %414 = vmatmul.f32.gmra.mxu0 %v396
  %v415 = vpop.f32.mrf.mxu0
  %v416 = vadd.f32 0.0, %v415
  %417 = vdwg.mxu0
  %v418 = vadd.f32 %v108, %v416
  %v419 = vxor.u32 %v418, 2147483648
  %v420 = vmul.f32 %v419, 1.442695
  %v421 = vpow.pop %v420
  %v422 = vadd.f32 %v421, 1.0
  %v423 = vrcp.pop %v422
  %v424 = vmul.f32 %v422, %v423
  %v425 = vsub.f32 1.0, %v424
  %v426 = vmul.f32 %v423, %v425
  %v427 = vadd.f32 %v423, %v426
  %vm428 = vweird.f32 %v422
  %vm429 = vweird.f32 %v423
  %vm430 = vmor %vm428, %vm429
  %v431 = vsel %vm430, %v423, %v427
  %v432 = vand.u32 2147483647, %v422
  %vm433 = vcmp.eq.f32.partialorder %v432, 8.507059e+37
  %v434 = vand.u32 %v422, 2147483648
  %v435 = vor.u32 1.1754944e-38, %v434
  %v436 = vsel %vm433, %v435, %v431
  %v437 = vmul.f32 1.0, %v436
  %v438 = vadd.f32 %v416, %v164
  %440 = vrot.lane.b32.xlu0 %v438, 64
  %v441 = vpop.permute.xlu0 %440
  %v443 = vmul.f32 %v437, %v441
  %445 = vrot.lane.b32.xlu0 %v443, 64
  %v446 = vpop.permute.xlu0 %445
  %v448 = vadd.f32 %v108, %v446
  %v449 = vtanh.pop %v448
  %v450 = vsub.f32 %v392, %v449
  %452 = vrot.lane.b32.xlu0 %v450, 96
  %v453 = vpop.permute.xlu0 %452
  %v455 = vmul.f32 %v437, %v453
  %457 = vrot.lane.b32.xlu0 %v455, 32
  %v458 = vpop.permute.xlu0 %457
  %v460 = vadd.f32 %v449, %v458
  %462 = vrot.lane.b32.xlu0 %v460, 64
  %v463 = vpop.permute.xlu0 %462
  %v464 = vsel %vm119, %v463, 0
  %466 = vmatpush.msra.mxu0 0.0
  %467 = vmatpush.msra.mxu0 0.0
  %468 = vmatpush.msra.mxu0 0.0
  %469 = vmatpush.msra.mxu0 0.0
  %470 = vmatpush.msra.mxu0 0.0
  %471 = vmatpush.msra.mxu0 0.0
  %472 = vmatpush.msra.mxu0 0.0
  %473 = vmatpush.msra.mxu0 0.0
  %474 = vmatpush.msra.mxu0 0.0
  %475 = vmatpush.msra.mxu0 0.0
  %476 = vmatpush.msra.mxu0 0.0
  %477 = vmatpush.msra.mxu0 0.0
  %478 = vmatpush.msra.mxu0 %v41
  %479 = vmatpush.msra.mxu0 %v40
  %480 = vmatpush.msra.mxu0 %v39
  %481 = vmatpush.msra.mxu0 %v38
  %482 = vmatmul.f32.gmra.mxu0 %v464
  %v483 = vpop.f32.mrf.mxu0
  %v484 = vadd.f32 0.0, %v483
  %485 = vdwg.mxu0
  %v486 = vadd.f32 %v111, %v484
  %v487 = vxor.u32 %v486, 2147483648
  %v488 = vmul.f32 %v487, 1.442695
  %v489 = vpow.pop %v488
  %v490 = vadd.f32 %v489, 1.0
  %v491 = vrcp.pop %v490
  %v492 = vmul.f32 %v490, %v491
  %v493 = vsub.f32 1.0, %v492
  %v494 = vmul.f32 %v491, %v493
  %v495 = vadd.f32 %v491, %v494
  %vm496 = vweird.f32 %v490
  %vm497 = vweird.f32 %v491
  %vm498 = vmor %vm496, %vm497
  %v499 = vsel %vm498, %v491, %v495
  %v500 = vand.u32 2147483647, %v490
  %vm501 = vcmp.eq.f32.partialorder %v500, 8.507059e+37
  %v502 = vand.u32 %v490, 2147483648
  %v503 = vor.u32 1.1754944e-38, %v502
  %v504 = vsel %vm501, %v503, %v499
  %v505 = vmul.f32 1.0, %v504
  %v506 = vadd.f32 %v484, %v164
  %508 = vrot.lane.b32.xlu0 %v506, 64
  %v509 = vpop.permute.xlu0 %508
  %v511 = vmul.f32 %v505, %v509
  %513 = vrot.lane.b32.xlu0 %v511, 64
  %v514 = vpop.permute.xlu0 %513
  %v516 = vadd.f32 %v111, %v514
  %v517 = vtanh.pop %v516
  %v518 = vsub.f32 %v460, %v517
  %520 = vrot.lane.b32.xlu0 %v518, 96
  %v521 = vpop.permute.xlu0 %520
  %v523 = vmul.f32 %v505, %v521
  %525 = vrot.lane.b32.xlu0 %v523, 32
  %v526 = vpop.permute.xlu0 %525
  %v528 = vadd.f32 %v517, %v526
  %530 = vrot.lane.b32.xlu0 %v528, 64
  %v531 = vpop.permute.xlu0 %530
  %v532 = vsel %vm119, %v531, 0
  %534 = vmatpush.msra.mxu0 0.0
  %535 = vmatpush.msra.mxu0 0.0
  %536 = vmatpush.msra.mxu0 0.0
  %537 = vmatpush.msra.mxu0 0.0
  %538 = vmatpush.msra.mxu0 0.0
  %539 = vmatpush.msra.mxu0 0.0
  %540 = vmatpush.msra.mxu0 0.0
  %541 = vmatpush.msra.mxu0 0.0
  %542 = vmatpush.msra.mxu0 0.0
  %543 = vmatpush.msra.mxu0 0.0
  %544 = vmatpush.msra.mxu0 0.0
  %545 = vmatpush.msra.mxu0 0.0
  %546 = vmatpush.msra.mxu0 %v41
  %547 = vmatpush.msra.mxu0 %v40
  %548 = vmatpush.msra.mxu0 %v39
  %549 = vmatpush.msra.mxu0 %v38
  %550 = vmatmul.f32.gmra.mxu0 %v532
  %v551 = vpop.f32.mrf.mxu0
  %v552 = vadd.f32 0.0, %v551
  %553 = vdwg.mxu0
  %v554 = vadd.f32 %v114, %v552
  %v555 = vxor.u32 %v554, 2147483648
  %v556 = vmul.f32 %v555, 1.442695
  %v557 = vpow.pop %v556
  %v558 = vadd.f32 %v557, 1.0
  %v559 = vrcp.pop %v558
  %v560 = vmul.f32 %v558, %v559
  %v561 = vsub.f32 1.0, %v560
  %v562 = vmul.f32 %v559, %v561
  %v563 = vadd.f32 %v559, %v562
  %vm564 = vweird.f32 %v558
  %vm565 = vweird.f32 %v559
  %vm566 = vmor %vm564, %vm565
  %v567 = vsel %vm566, %v559, %v563
  %v568 = vand.u32 2147483647, %v558
  %vm569 = vcmp.eq.f32.partialorder %v568, 8.507059e+37
  %v570 = vand.u32 %v558, 2147483648
  %v571 = vor.u32 1.1754944e-38, %v570
  %v572 = vsel %vm569, %v571, %v567
  %v573 = vmul.f32 1.0, %v572
  %v574 = vadd.f32 %v552, %v164
  %576 = vrot.lane.b32.xlu0 %v574, 64
  %v577 = vpop.permute.xlu0 %576
  %v579 = vmul.f32 %v573, %v577
  %581 = vrot.lane.b32.xlu0 %v579, 64
  %v582 = vpop.permute.xlu0 %581
  %v584 = vadd.f32 %v114, %v582
  %v585 = vtanh.pop %v584
  %v586 = vsub.f32 %v528, %v585
  %588 = vrot.lane.b32.xlu0 %v586, 96
  %v589 = vpop.permute.xlu0 %588
  %v591 = vmul.f32 %v573, %v589
  %593 = vrot.lane.b32.xlu0 %v591, 32
  %v594 = vpop.permute.xlu0 %593
  %v596 = vadd.f32 %v585, %v594
  %598 = vrot.lane.b32.xlu0 %v596, 64
  %v599 = vpop.permute.xlu0 %598
  %v600 = vsel %vm119, %v599, 0
  %602 = vmatpush.msra.mxu0 0.0
  %603 = vmatpush.msra.mxu0 0.0
  %604 = vmatpush.msra.mxu0 0.0
  %605 = vmatpush.msra.mxu0 0.0
  %606 = vmatpush.msra.mxu0 0.0
  %607 = vmatpush.msra.mxu0 0.0
  %608 = vmatpush.msra.mxu0 0.0
  %609 = vmatpush.msra.mxu0 0.0
  %610 = vmatpush.msra.mxu0 0.0
  %611 = vmatpush.msra.mxu0 0.0
  %612 = vmatpush.msra.mxu0 0.0
  %613 = vmatpush.msra.mxu0 0.0
  %614 = vmatpush.msra.mxu0 %v41
  %615 = vmatpush.msra.mxu0 %v40
  %616 = vmatpush.msra.mxu0 %v39
  %617 = vmatpush.msra.mxu0 %v38
  %618 = vmatmul.f32.gmra.mxu0 %v600
  %v619 = vpop.f32.mrf.mxu0
  %v620 = vadd.f32 0.0, %v619
  %621 = vdwg.mxu0
  %v622 = vadd.f32 %v117, %v620
  %v623 = vxor.u32 %v622, 2147483648
  %v624 = vmul.f32 %v623, 1.442695
  %v625 = vpow.pop %v624
  %v626 = vadd.f32 %v625, 1.0
  %v627 = vrcp.pop %v626
  %v628 = vmul.f32 %v626, %v627
  %v629 = vsub.f32 1.0, %v628
  %v630 = vmul.f32 %v627, %v629
  %v631 = vadd.f32 %v627, %v630
  %vm632 = vweird.f32 %v626
  %vm633 = vweird.f32 %v627
  %vm634 = vmor %vm632, %vm633
  %v635 = vsel %vm634, %v627, %v631
  %v636 = vand.u32 2147483647, %v626
  %vm637 = vcmp.eq.f32.partialorder %v636, 8.507059e+37
  %v638 = vand.u32 %v626, 2147483648
  %v639 = vor.u32 1.1754944e-38, %v638
  %v640 = vsel %vm637, %v639, %v635
  %v641 = vmul.f32 1.0, %v640
  %v642 = vadd.f32 %v620, %v164
  %644 = vrot.lane.b32.xlu0 %v642, 64
  %v645 = vpop.permute.xlu0 %644
  %v647 = vmul.f32 %v641, %v645
  %649 = vrot.lane.b32.xlu0 %v647, 64
  %v650 = vpop.permute.xlu0 %649
  %v652 = vadd.f32 %v117, %v650
  %v653 = vtanh.pop %v652
  %v654 = vsub.f32 %v596, %v653
  %656 = vrot.lane.b32.xlu0 %v654, 96
  %v657 = vpop.permute.xlu0 %656
  %v659 = vmul.f32 %v641, %v657
  %661 = vrot.lane.b32.xlu0 %v659, 32
  %v662 = vpop.permute.xlu0 %661
  %v664 = vadd.f32 %v653, %v662
  %v665 = vld [vmem:[%s2] sm:$0xff]
  %v666 = vld [vmem:[%s2 + $0x8] sm:$0xff]
  %v667 = vld [vmem:[%s2 + $0x10] sm:$0xff]
  %v668 = vld [vmem:[%s2 + $0x18] sm:$0xff]
  %s669 = scalar_lea.vmem %s3, 32
  %v670 = vld [vmem:[%s669] sm:$0xff]
  %v671 = vld [vmem:[%s669 + $0x8] sm:$0xff]
  %v672 = vld [vmem:[%s669 + $0x10] sm:$0xff]
  %v673 = vld [vmem:[%s669 + $0x18] sm:$0xff]
  %s674 = scalar_lea.vmem %s4, 1
  %v675 = vld [vmem:[%s674] sm:$0x1]
  %s676 = scalar_lea.vmem %s5, 1
  %v677 = vld [vmem:[%s676] sm:$0x1]
  %v679 = vperm.slane %v677, 0
  %v681 = vperm.slane %v675, 0
  %684 = vrot.lane.b32.xlu0 %v664, 64
  %v685 = vpop.permute.xlu0 %684
  %v686 = vsel %vm119, %v685, 0
  %688 = vmatpush.msra.mxu0 0.0
  %689 = vmatpush.msra.mxu0 0.0
  %690 = vmatpush.msra.mxu0 0.0
  %691 = vmatpush.msra.mxu0 0.0
  %692 = vmatpush.msra.mxu0 0.0
  %693 = vmatpush.msra.mxu0 0.0
  %694 = vmatpush.msra.mxu0 0.0
  %695 = vmatpush.msra.mxu0 0.0
  %696 = vmatpush.msra.mxu0 0.0
  %697 = vmatpush.msra.mxu0 0.0
  %698 = vmatpush.msra.mxu0 0.0
  %699 = vmatpush.msra.mxu0 0.0
  %700 = vmatpush.msra.mxu0 %v668
  %701 = vmatpush.msra.mxu0 %v667
  %702 = vmatpush.msra.mxu0 %v666
  %703 = vmatpush.msra.mxu0 %v665
  %704 = vmatmul.f32.gmra.mxu0 %v192
  %v705 = vpop.f32.mrf.mxu0
  %v706 = vadd.f32 %v681, %v705
  %707 = vmatmul.f32.gmra.mxu0 %v260
  %v708 = vpop.f32.mrf.mxu0
  %v709 = vadd.f32 %v681, %v708
  %710 = vmatmul.f32.gmra.mxu0 %v328
  %v711 = vpop.f32.mrf.mxu0
  %v712 = vadd.f32 %v681, %v711
  %713 = vmatmul.f32.gmra.mxu0 %v396
  %v714 = vpop.f32.mrf.mxu0
  %v715 = vadd.f32 %v681, %v714
  %716 = vmatmul.f32.gmra.mxu0 %v464
  %v717 = vpop.f32.mrf.mxu0
  %v718 = vadd.f32 %v681, %v717
  %719 = vmatmul.f32.gmra.mxu0 %v532
  %v720 = vpop.f32.mrf.mxu0
  %v721 = vadd.f32 %v681, %v720
  %722 = vmatmul.f32.gmra.mxu0 %v600
  %v723 = vpop.f32.mrf.mxu0
  %v724 = vadd.f32 %v681, %v723
  %725 = vmatmul.f32.gmra.mxu0 %v686
  %v726 = vpop.f32.mrf.mxu0
  %v727 = vadd.f32 %v681, %v726
  %728 = vdwg.mxu0
  %729 = vmatpush.msra.mxu0 0.0
  %730 = vmatpush.msra.mxu0 0.0
  %731 = vmatpush.msra.mxu0 0.0
  %732 = vmatpush.msra.mxu0 0.0
  %733 = vmatpush.msra.mxu0 0.0
  %734 = vmatpush.msra.mxu0 0.0
  %735 = vmatpush.msra.mxu0 0.0
  %736 = vmatpush.msra.mxu0 0.0
  %737 = vmatpush.msra.mxu0 0.0
  %738 = vmatpush.msra.mxu0 0.0
  %739 = vmatpush.msra.mxu0 0.0
  %740 = vmatpush.msra.mxu0 0.0
  %741 = vmatpush.msra.mxu0 %v673
  %742 = vmatpush.msra.mxu0 %v672
  %743 = vmatpush.msra.mxu0 %v671
  %744 = vmatpush.msra.mxu0 %v670
  %745 = vmatmul.f32.gmra.mxu0 %v121
  %v746 = vpop.f32.mrf.mxu0
  %v747 = vadd.f32 0.0, %v746
  %748 = vdwg.mxu0
  %v749 = vadd.f32 %v706, %v747
  %v750 = vxor.u32 %v749, 2147483648
  %v751 = vmul.f32 %v750, 1.442695
  %v752 = vpow.pop %v751
  %v753 = vadd.f32 %v752, 1.0
  %v754 = vrcp.pop %v753
  %v755 = vmul.f32 %v753, %v754
  %v756 = vsub.f32 1.0, %v755
  %v757 = vmul.f32 %v754, %v756
  %v758 = vadd.f32 %v754, %v757
  %vm759 = vweird.f32 %v753
  %vm760 = vweird.f32 %v754
  %vm761 = vmor %vm759, %vm760
  %v762 = vsel %vm761, %v754, %v758
  %v763 = vand.u32 2147483647, %v753
  %vm764 = vcmp.eq.f32.partialorder %v763, 8.507059e+37
  %v765 = vand.u32 %v753, 2147483648
  %v766 = vor.u32 1.1754944e-38, %v765
  %v767 = vsel %vm764, %v766, %v762
  %v768 = vmul.f32 1.0, %v767
  %769 = vrot.lane.b32.xlu0 %v679, 64
  %v770 = vpop.permute.xlu0 %769
  %v772 = vadd.f32 %v747, %v770
  %774 = vrot.lane.b32.xlu0 %v772, 64
  %v775 = vpop.permute.xlu0 %774
  %v777 = vmul.f32 %v768, %v775
  %779 = vrot.lane.b32.xlu0 %v777, 64
  %v780 = vpop.permute.xlu0 %779
  %v782 = vadd.f32 %v706, %v780
  %v783 = vtanh.pop %v782
  %v784 = vsub.f32 0.0, %v783
  %786 = vrot.lane.b32.xlu0 %v784, 96
  %v787 = vpop.permute.xlu0 %786
  %v789 = vmul.f32 %v768, %v787
  %791 = vrot.lane.b32.xlu0 %v789, 32
  %v792 = vpop.permute.xlu0 %791
  %v794 = vadd.f32 %v783, %v792
  %796 = vrot.lane.b32.xlu0 %v794, 64
  %v797 = vpop.permute.xlu0 %796
  %v798 = vsel %vm119, %v797, 0
  %800 = vmatpush.msra.mxu0 0.0
  %801 = vmatpush.msra.mxu0 0.0
  %802 = vmatpush.msra.mxu0 0.0
  %803 = vmatpush.msra.mxu0 0.0
  %804 = vmatpush.msra.mxu0 0.0
  %805 = vmatpush.msra.mxu0 0.0
  %806 = vmatpush.msra.mxu0 0.0
  %807 = vmatpush.msra.mxu0 0.0
  %808 = vmatpush.msra.mxu0 0.0
  %809 = vmatpush.msra.mxu0 0.0
  %810 = vmatpush.msra.mxu0 0.0
  %811 = vmatpush.msra.mxu0 0.0
  %812 = vmatpush.msra.mxu0 %v673
  %813 = vmatpush.msra.mxu0 %v672
  %814 = vmatpush.msra.mxu0 %v671
  %815 = vmatpush.msra.mxu0 %v670
  %816 = vmatmul.f32.gmra.mxu0 %v798
  %v817 = vpop.f32.mrf.mxu0
  %v818 = vadd.f32 0.0, %v817
  %819 = vdwg.mxu0
  %v820 = vadd.f32 %v709, %v818
  %v821 = vxor.u32 %v820, 2147483648
  %v822 = vmul.f32 %v821, 1.442695
  %v823 = vpow.pop %v822
  %v824 = vadd.f32 %v823, 1.0
  %v825 = vrcp.pop %v824
  %v826 = vmul.f32 %v824, %v825
  %v827 = vsub.f32 1.0, %v826
  %v828 = vmul.f32 %v825, %v827
  %v829 = vadd.f32 %v825, %v828
  %vm830 = vweird.f32 %v824
  %vm831 = vweird.f32 %v825
  %vm832 = vmor %vm830, %vm831
  %v833 = vsel %vm832, %v825, %v829
  %v834 = vand.u32 2147483647, %v824
  %vm835 = vcmp.eq.f32.partialorder %v834, 8.507059e+37
  %v836 = vand.u32 %v824, 2147483648
  %v837 = vor.u32 1.1754944e-38, %v836
  %v838 = vsel %vm835, %v837, %v833
  %v839 = vmul.f32 1.0, %v838
  %v840 = vadd.f32 %v818, %v770
  %842 = vrot.lane.b32.xlu0 %v840, 64
  %v843 = vpop.permute.xlu0 %842
  %v845 = vmul.f32 %v839, %v843
  %847 = vrot.lane.b32.xlu0 %v845, 64
  %v848 = vpop.permute.xlu0 %847
  %v850 = vadd.f32 %v709, %v848
  %v851 = vtanh.pop %v850
  %v852 = vsub.f32 %v794, %v851
  %854 = vrot.lane.b32.xlu0 %v852, 96
  %v855 = vpop.permute.xlu0 %854
  %v857 = vmul.f32 %v839, %v855
  %859 = vrot.lane.b32.xlu0 %v857, 32
  %v860 = vpop.permute.xlu0 %859
  %v862 = vadd.f32 %v851, %v860
  %864 = vrot.lane.b32.xlu0 %v862, 64
  %v865 = vpop.permute.xlu0 %864
  %v866 = vsel %vm119, %v865, 0
  %868 = vmatpush.msra.mxu0 0.0
  %869 = vmatpush.msra.mxu0 0.0
  %870 = vmatpush.msra.mxu0 0.0
  %871 = vmatpush.msra.mxu0 0.0
  %872 = vmatpush.msra.mxu0 0.0
  %873 = vmatpush.msra.mxu0 0.0
  %874 = vmatpush.msra.mxu0 0.0
  %875 = vmatpush.msra.mxu0 0.0
  %876 = vmatpush.msra.mxu0 0.0
  %877 = vmatpush.msra.mxu0 0.0
  %878 = vmatpush.msra.mxu0 0.0
  %879 = vmatpush.msra.mxu0 0.0
  %880 = vmatpush.msra.mxu0 %v673
  %881 = vmatpush.msra.mxu0 %v672
  %882 = vmatpush.msra.mxu0 %v671
  %883 = vmatpush.msra.mxu0 %v670
  %884 = vmatmul.f32.gmra.mxu0 %v866
  %v885 = vpop.f32.mrf.mxu0
  %v886 = vadd.f32 0.0, %v885
  %887 = vdwg.mxu0
  %v888 = vadd.f32 %v712, %v886
  %v889 = vxor.u32 %v888, 2147483648
  %v890 = vmul.f32 %v889, 1.442695
  %v891 = vpow.pop %v890
  %v892 = vadd.f32 %v891, 1.0
  %v893 = vrcp.pop %v892
  %v894 = vmul.f32 %v892, %v893
  %v895 = vsub.f32 1.0, %v894
  %v896 = vmul.f32 %v893, %v895
  %v897 = vadd.f32 %v893, %v896
  %vm898 = vweird.f32 %v892
  %vm899 = vweird.f32 %v893
  %vm900 = vmor %vm898, %vm899
  %v901 = vsel %vm900, %v893, %v897
  %v902 = vand.u32 2147483647, %v892
  %vm903 = vcmp.eq.f32.partialorder %v902, 8.507059e+37
  %v904 = vand.u32 %v892, 2147483648
  %v905 = vor.u32 1.1754944e-38, %v904
  %v906 = vsel %vm903, %v905, %v901
  %v907 = vmul.f32 1.0, %v906
  %v908 = vadd.f32 %v886, %v770
  %910 = vrot.lane.b32.xlu0 %v908, 64
  %v911 = vpop.permute.xlu0 %910
  %v913 = vmul.f32 %v907, %v911
  %915 = vrot.lane.b32.xlu0 %v913, 64
  %v916 = vpop.permute.xlu0 %915
  %v918 = vadd.f32 %v712, %v916
  %v919 = vtanh.pop %v918
  %v920 = vsub.f32 %v862, %v919
  %922 = vrot.lane.b32.xlu0 %v920, 96
  %v923 = vpop.permute.xlu0 %922
  %v925 = vmul.f32 %v907, %v923
  %927 = vrot.lane.b32.xlu0 %v925, 32
  %v928 = vpop.permute.xlu0 %927
  %v930 = vadd.f32 %v919, %v928
  %932 = vrot.lane.b32.xlu0 %v930, 64
  %v933 = vpop.permute.xlu0 %932
  %v934 = vsel %vm119, %v933, 0
  %936 = vmatpush.msra.mxu0 0.0
  %937 = vmatpush.msra.mxu0 0.0
  %938 = vmatpush.msra.mxu0 0.0
  %939 = vmatpush.msra.mxu0 0.0
  %940 = vmatpush.msra.mxu0 0.0
  %941 = vmatpush.msra.mxu0 0.0
  %942 = vmatpush.msra.mxu0 0.0
  %943 = vmatpush.msra.mxu0 0.0
  %944 = vmatpush.msra.mxu0 0.0
  %945 = vmatpush.msra.mxu0 0.0
  %946 = vmatpush.msra.mxu0 0.0
  %947 = vmatpush.msra.mxu0 0.0
  %948 = vmatpush.msra.mxu0 %v673
  %949 = vmatpush.msra.mxu0 %v672
  %950 = vmatpush.msra.mxu0 %v671
  %951 = vmatpush.msra.mxu0 %v670
  %952 = vmatmul.f32.gmra.mxu0 %v934
  %v953 = vpop.f32.mrf.mxu0
  %v954 = vadd.f32 0.0, %v953
  %955 = vdwg.mxu0
  %v956 = vadd.f32 %v715, %v954
  %v957 = vxor.u32 %v956, 2147483648
  %v958 = vmul.f32 %v957, 1.442695
  %v959 = vpow.pop %v958
  %v960 = vadd.f32 %v959, 1.0
  %v961 = vrcp.pop %v960
  %v962 = vmul.f32 %v960, %v961
  %v963 = vsub.f32 1.0, %v962
  %v964 = vmul.f32 %v961, %v963
  %v965 = vadd.f32 %v961, %v964
  %vm966 = vweird.f32 %v960
  %vm967 = vweird.f32 %v961
  %vm968 = vmor %vm966, %vm967
  %v969 = vsel %vm968, %v961, %v965
  %v970 = vand.u32 2147483647, %v960
  %vm971 = vcmp.eq.f32.partialorder %v970, 8.507059e+37
  %v972 = vand.u32 %v960, 2147483648
  %v973 = vor.u32 1.1754944e-38, %v972
  %v974 = vsel %vm971, %v973, %v969
  %v975 = vmul.f32 1.0, %v974
  %v976 = vadd.f32 %v954, %v770
  %978 = vrot.lane.b32.xlu0 %v976, 64
  %v979 = vpop.permute.xlu0 %978
  %v981 = vmul.f32 %v975, %v979
  %983 = vrot.lane.b32.xlu0 %v981, 64
  %v984 = vpop.permute.xlu0 %983
  %v986 = vadd.f32 %v715, %v984
  %v987 = vtanh.pop %v986
  %v988 = vsub.f32 %v930, %v987
  %990 = vrot.lane.b32.xlu0 %v988, 96
  %v991 = vpop.permute.xlu0 %990
  %v993 = vmul.f32 %v975, %v991
  %995 = vrot.lane.b32.xlu0 %v993, 32
  %v996 = vpop.permute.xlu0 %995
  %v998 = vadd.f32 %v987, %v996
  %1000 = vrot.lane.b32.xlu0 %v998, 64
  %v1001 = vpop.permute.xlu0 %1000
  %v1002 = vsel %vm119, %v1001, 0
  %1004 = vmatpush.msra.mxu0 0.0
  %1005 = vmatpush.msra.mxu0 0.0
  %1006 = vmatpush.msra.mxu0 0.0
  %1007 = vmatpush.msra.mxu0 0.0
  %1008 = vmatpush.msra.mxu0 0.0
  %1009 = vmatpush.msra.mxu0 0.0
  %1010 = vmatpush.msra.mxu0 0.0
  %1011 = vmatpush.msra.mxu0 0.0
  %1012 = vmatpush.msra.mxu0 0.0
  %1013 = vmatpush.msra.mxu0 0.0
  %1014 = vmatpush.msra.mxu0 0.0
  %1015 = vmatpush.msra.mxu0 0.0
  %1016 = vmatpush.msra.mxu0 %v673
  %1017 = vmatpush.msra.mxu0 %v672
  %1018 = vmatpush.msra.mxu0 %v671
  %1019 = vmatpush.msra.mxu0 %v670
  %1020 = vmatmul.f32.gmra.mxu0 %v1002
  %v1021 = vpop.f32.mrf.mxu0
  %v1022 = vadd.f32 0.0, %v1021
  %1023 = vdwg.mxu0
  %v1024 = vadd.f32 %v718, %v1022
  %v1025 = vxor.u32 %v1024, 2147483648
  %v1026 = vmul.f32 %v1025, 1.442695
  %v1027 = vpow.pop %v1026
  %v1028 = vadd.f32 %v1027, 1.0
  %v1029 = vrcp.pop %v1028
  %v1030 = vmul.f32 %v1028, %v1029
  %v1031 = vsub.f32 1.0, %v1030
  %v1032 = vmul.f32 %v1029, %v1031
  %v1033 = vadd.f32 %v1029, %v1032
  %vm1034 = vweird.f32 %v1028
  %vm1035 = vweird.f32 %v1029
  %vm1036 = vmor %vm1034, %vm1035
  %v1037 = vsel %vm1036, %v1029, %v1033
  %v1038 = vand.u32 2147483647, %v1028
  %vm1039 = vcmp.eq.f32.partialorder %v1038, 8.507059e+37
  %v1040 = vand.u32 %v1028, 2147483648
  %v1041 = vor.u32 1.1754944e-38, %v1040
  %v1042 = vsel %vm1039, %v1041, %v1037
  %v1043 = vmul.f32 1.0, %v1042
  %v1044 = vadd.f32 %v1022, %v770
  %1046 = vrot.lane.b32.xlu0 %v1044, 64
  %v1047 = vpop.permute.xlu0 %1046
  %v1049 = vmul.f32 %v1043, %v1047
  %1051 = vrot.lane.b32.xlu0 %v1049, 64
  %v1052 = vpop.permute.xlu0 %1051
  %v1054 = vadd.f32 %v718, %v1052
  %v1055 = vtanh.pop %v1054
  %v1056 = vsub.f32 %v998, %v1055
  %1058 = vrot.lane.b32.xlu0 %v1056, 96
  %v1059 = vpop.permute.xlu0 %1058
  %v1061 = vmul.f32 %v1043, %v1059
  %1063 = vrot.lane.b32.xlu0 %v1061, 32
  %v1064 = vpop.permute.xlu0 %1063
  %v1066 = vadd.f32 %v1055, %v1064
  %1068 = vrot.lane.b32.xlu0 %v1066, 64
  %v1069 = vpop.permute.xlu0 %1068
  %v1070 = vsel %vm119, %v1069, 0
  %1072 = vmatpush.msra.mxu0 0.0
  %1073 = vmatpush.msra.mxu0 0.0
  %1074 = vmatpush.msra.mxu0 0.0
  %1075 = vmatpush.msra.mxu0 0.0
  %1076 = vmatpush.msra.mxu0 0.0
  %1077 = vmatpush.msra.mxu0 0.0
  %1078 = vmatpush.msra.mxu0 0.0
  %1079 = vmatpush.msra.mxu0 0.0
  %1080 = vmatpush.msra.mxu0 0.0
  %1081 = vmatpush.msra.mxu0 0.0
  %1082 = vmatpush.msra.mxu0 0.0
  %1083 = vmatpush.msra.mxu0 0.0
  %1084 = vmatpush.msra.mxu0 %v673
  %1085 = vmatpush.msra.mxu0 %v672
  %1086 = vmatpush.msra.mxu0 %v671
  %1087 = vmatpush.msra.mxu0 %v670
  %1088 = vmatmul.f32.gmra.mxu0 %v1070
  %v1089 = vpop.f32.mrf.mxu0
  %v1090 = vadd.f32 0.0, %v1089
  %1091 = vdwg.mxu0
  %v1092 = vadd.f32 %v721, %v1090
  %v1093 = vxor.u32 %v1092, 2147483648
  %v1094 = vmul.f32 %v1093, 1.442695
  %v1095 = vpow.pop %v1094
  %v1096 = vadd.f32 %v1095, 1.0
  %v1097 = vrcp.pop %v1096
  %v1098 = vmul.f32 %v1096, %v1097
  %v1099 = vsub.f32 1.0, %v1098
  %v1100 = vmul.f32 %v1097, %v1099
  %v1101 = vadd.f32 %v1097, %v1100
  %vm1102 = vweird.f32 %v1096
  %vm1103 = vweird.f32 %v1097
  %vm1104 = vmor %vm1102, %vm1103
  %v1105 = vsel %vm1104, %v1097, %v1101
  %v1106 = vand.u32 2147483647, %v1096
  %vm1107 = vcmp.eq.f32.partialorder %v1106, 8.507059e+37
  %v1108 = vand.u32 %v1096, 2147483648
  %v1109 = vor.u32 1.1754944e-38, %v1108
  %v1110 = vsel %vm1107, %v1109, %v1105
  %v1111 = vmul.f32 1.0, %v1110
  %v1112 = vadd.f32 %v1090, %v770
  %1114 = vrot.lane.b32.xlu0 %v1112, 64
  %v1115 = vpop.permute.xlu0 %1114
  %v1117 = vmul.f32 %v1111, %v1115
  %1119 = vrot.lane.b32.xlu0 %v1117, 64
  %v1120 = vpop.permute.xlu0 %1119
  %v1122 = vadd.f32 %v721, %v1120
  %v1123 = vtanh.pop %v1122
  %v1124 = vsub.f32 %v1066, %v1123
  %1126 = vrot.lane.b32.xlu0 %v1124, 96
  %v1127 = vpop.permute.xlu0 %1126
  %v1129 = vmul.f32 %v1111, %v1127
  %1131 = vrot.lane.b32.xlu0 %v1129, 32
  %v1132 = vpop.permute.xlu0 %1131
  %v1134 = vadd.f32 %v1123, %v1132
  %1136 = vrot.lane.b32.xlu0 %v1134, 64
  %v1137 = vpop.permute.xlu0 %1136
  %v1138 = vsel %vm119, %v1137, 0
  %1140 = vmatpush.msra.mxu0 0.0
  %1141 = vmatpush.msra.mxu0 0.0
  %1142 = vmatpush.msra.mxu0 0.0
  %1143 = vmatpush.msra.mxu0 0.0
  %1144 = vmatpush.msra.mxu0 0.0
  %1145 = vmatpush.msra.mxu0 0.0
  %1146 = vmatpush.msra.mxu0 0.0
  %1147 = vmatpush.msra.mxu0 0.0
  %1148 = vmatpush.msra.mxu0 0.0
  %1149 = vmatpush.msra.mxu0 0.0
  %1150 = vmatpush.msra.mxu0 0.0
  %1151 = vmatpush.msra.mxu0 0.0
  %1152 = vmatpush.msra.mxu0 %v673
  %1153 = vmatpush.msra.mxu0 %v672
  %1154 = vmatpush.msra.mxu0 %v671
  %1155 = vmatpush.msra.mxu0 %v670
  %1156 = vmatmul.f32.gmra.mxu0 %v1138
  %v1157 = vpop.f32.mrf.mxu0
  %v1158 = vadd.f32 0.0, %v1157
  %1159 = vdwg.mxu0
  %v1160 = vadd.f32 %v724, %v1158
  %v1161 = vxor.u32 %v1160, 2147483648
  %v1162 = vmul.f32 %v1161, 1.442695
  %v1163 = vpow.pop %v1162
  %v1164 = vadd.f32 %v1163, 1.0
  %v1165 = vrcp.pop %v1164
  %v1166 = vmul.f32 %v1164, %v1165
  %v1167 = vsub.f32 1.0, %v1166
  %v1168 = vmul.f32 %v1165, %v1167
  %v1169 = vadd.f32 %v1165, %v1168
  %vm1170 = vweird.f32 %v1164
  %vm1171 = vweird.f32 %v1165
  %vm1172 = vmor %vm1170, %vm1171
  %v1173 = vsel %vm1172, %v1165, %v1169
  %v1174 = vand.u32 2147483647, %v1164
  %vm1175 = vcmp.eq.f32.partialorder %v1174, 8.507059e+37
  %v1176 = vand.u32 %v1164, 2147483648
  %v1177 = vor.u32 1.1754944e-38, %v1176
  %v1178 = vsel %vm1175, %v1177, %v1173
  %v1179 = vmul.f32 1.0, %v1178
  %v1180 = vadd.f32 %v1158, %v770
  %1182 = vrot.lane.b32.xlu0 %v1180, 64
  %v1183 = vpop.permute.xlu0 %1182
  %v1185 = vmul.f32 %v1179, %v1183
  %1187 = vrot.lane.b32.xlu0 %v1185, 64
  %v1188 = vpop.permute.xlu0 %1187
  %v1190 = vadd.f32 %v724, %v1188
  %v1191 = vtanh.pop %v1190
  %v1192 = vsub.f32 %v1134, %v1191
  %1194 = vrot.lane.b32.xlu0 %v1192, 96
  %v1195 = vpop.permute.xlu0 %1194
  %v1197 = vmul.f32 %v1179, %v1195
  %1199 = vrot.lane.b32.xlu0 %v1197, 32
  %v1200 = vpop.permute.xlu0 %1199
  %v1202 = vadd.f32 %v1191, %v1200
  %1204 = vrot.lane.b32.xlu0 %v1202, 64
  %v1205 = vpop.permute.xlu0 %1204
  %v1206 = vsel %vm119, %v1205, 0
  %1208 = vmatpush.msra.mxu0 0.0
  %1209 = vmatpush.msra.mxu0 0.0
  %1210 = vmatpush.msra.mxu0 0.0
  %1211 = vmatpush.msra.mxu0 0.0
  %1212 = vmatpush.msra.mxu0 0.0
  %1213 = vmatpush.msra.mxu0 0.0
  %1214 = vmatpush.msra.mxu0 0.0
  %1215 = vmatpush.msra.mxu0 0.0
  %1216 = vmatpush.msra.mxu0 0.0
  %1217 = vmatpush.msra.mxu0 0.0
  %1218 = vmatpush.msra.mxu0 0.0
  %1219 = vmatpush.msra.mxu0 0.0
  %1220 = vmatpush.msra.mxu0 %v673
  %1221 = vmatpush.msra.mxu0 %v672
  %1222 = vmatpush.msra.mxu0 %v671
  %1223 = vmatpush.msra.mxu0 %v670
  %1224 = vmatmul.f32.gmra.mxu0 %v1206
  %v1225 = vpop.f32.mrf.mxu0
  %v1226 = vadd.f32 0.0, %v1225
  %1227 = vdwg.mxu0
  %v1228 = vadd.f32 %v727, %v1226
  %v1229 = vxor.u32 %v1228, 2147483648
  %v1230 = vmul.f32 %v1229, 1.442695
  %v1231 = vpow.pop %v1230
  %v1232 = vadd.f32 %v1231, 1.0
  %v1233 = vrcp.pop %v1232
  %v1234 = vmul.f32 %v1232, %v1233
  %v1235 = vsub.f32 1.0, %v1234
  %v1236 = vmul.f32 %v1233, %v1235
  %v1237 = vadd.f32 %v1233, %v1236
  %vm1238 = vweird.f32 %v1232
  %vm1239 = vweird.f32 %v1233
  %vm1240 = vmor %vm1238, %vm1239
  %v1241 = vsel %vm1240, %v1233, %v1237
  %v1242 = vand.u32 2147483647, %v1232
  %vm1243 = vcmp.eq.f32.partialorder %v1242, 8.507059e+37
  %v1244 = vand.u32 %v1232, 2147483648
  %v1245 = vor.u32 1.1754944e-38, %v1244
  %v1246 = vsel %vm1243, %v1245, %v1241
  %v1247 = vmul.f32 1.0, %v1246
  %v1248 = vadd.f32 %v1226, %v770
  %1250 = vrot.lane.b32.xlu0 %v1248, 64
  %v1251 = vpop.permute.xlu0 %1250
  %v1253 = vmul.f32 %v1247, %v1251
  %1255 = vrot.lane.b32.xlu0 %v1253, 64
  %v1256 = vpop.permute.xlu0 %1255
  %v1258 = vadd.f32 %v727, %v1256
  %v1259 = vtanh.pop %v1258
  %v1260 = vsub.f32 %v1202, %v1259
  %1262 = vrot.lane.b32.xlu0 %v1260, 96
  %v1263 = vpop.permute.xlu0 %1262
  %v1265 = vmul.f32 %v1247, %v1263
  %1267 = vrot.lane.b32.xlu0 %v1265, 32
  %v1268 = vpop.permute.xlu0 %1267
  %v1270 = vadd.f32 %v1259, %v1268
  %s1271 = scalar_lea.vmem %s2, 32
  %v1272 = vld [vmem:[%s1271] sm:$0xff]
  %v1273 = vld [vmem:[%s1271 + $0x8] sm:$0xff]
  %v1274 = vld [vmem:[%s1271 + $0x10] sm:$0xff]
  %v1275 = vld [vmem:[%s1271 + $0x18] sm:$0xff]
  %s1276 = scalar_lea.vmem %s3, 64
  %v1277 = vld [vmem:[%s1276] sm:$0xff]
  %v1278 = vld [vmem:[%s1276 + $0x8] sm:$0xff]
  %v1279 = vld [vmem:[%s1276 + $0x10] sm:$0xff]
  %v1280 = vld [vmem:[%s1276 + $0x18] sm:$0xff]
  %s1281 = scalar_lea.vmem %s4, 2
  %v1282 = vld [vmem:[%s1281] sm:$0x1]
  %s1283 = scalar_lea.vmem %s5, 2
  %v1284 = vld [vmem:[%s1283] sm:$0x1]
  %v1286 = vperm.slane %v1284, 0
  %v1288 = vperm.slane %v1282, 0
  %1291 = vrot.lane.b32.xlu0 %v1270, 64
  %v1292 = vpop.permute.xlu0 %1291
  %v1293 = vsel %vm119, %v1292, 0
  %1295 = vmatpush.msra.mxu0 0.0
  %1296 = vmatpush.msra.mxu0 0.0
  %1297 = vmatpush.msra.mxu0 0.0
  %1298 = vmatpush.msra.mxu0 0.0
  %1299 = vmatpush.msra.mxu0 0.0
  %1300 = vmatpush.msra.mxu0 0.0
  %1301 = vmatpush.msra.mxu0 0.0
  %1302 = vmatpush.msra.mxu0 0.0
  %1303 = vmatpush.msra.mxu0 0.0
  %1304 = vmatpush.msra.mxu0 0.0
  %1305 = vmatpush.msra.mxu0 0.0
  %1306 = vmatpush.msra.mxu0 0.0
  %1307 = vmatpush.msra.mxu0 %v1275
  %1308 = vmatpush.msra.mxu0 %v1274
  %1309 = vmatpush.msra.mxu0 %v1273
  %1310 = vmatpush.msra.mxu0 %v1272
  %1311 = vmatmul.f32.gmra.mxu0 %v798
  %v1312 = vpop.f32.mrf.mxu0
  %v1313 = vadd.f32 %v1288, %v1312
  %1314 = vmatmul.f32.gmra.mxu0 %v866
  %v1315 = vpop.f32.mrf.mxu0
  %v1316 = vadd.f32 %v1288, %v1315
  %1317 = vmatmul.f32.gmra.mxu0 %v934
  %v1318 = vpop.f32.mrf.mxu0
  %v1319 = vadd.f32 %v1288, %v1318
  %1320 = vmatmul.f32.gmra.mxu0 %v1002
  %v1321 = vpop.f32.mrf.mxu0
  %v1322 = vadd.f32 %v1288, %v1321
  %1323 = vmatmul.f32.gmra.mxu0 %v1070
  %v1324 = vpop.f32.mrf.mxu0
  %v1325 = vadd.f32 %v1288, %v1324
  %1326 = vmatmul.f32.gmra.mxu0 %v1138
  %v1327 = vpop.f32.mrf.mxu0
  %v1328 = vadd.f32 %v1288, %v1327
  %1329 = vmatmul.f32.gmra.mxu0 %v1206
  %v1330 = vpop.f32.mrf.mxu0
  %v1331 = vadd.f32 %v1288, %v1330
  %1332 = vmatmul.f32.gmra.mxu0 %v1293
  %v1333 = vpop.f32.mrf.mxu0
  %v1334 = vadd.f32 %v1288, %v1333
  %1335 = vdwg.mxu0
  %1336 = vmatpush.msra.mxu0 0.0
  %1337 = vmatpush.msra.mxu0 0.0
  %1338 = vmatpush.msra.mxu0 0.0
  %1339 = vmatpush.msra.mxu0 0.0
  %1340 = vmatpush.msra.mxu0 0.0
  %1341 = vmatpush.msra.mxu0 0.0
  %1342 = vmatpush.msra.mxu0 0.0
  %1343 = vmatpush.msra.mxu0 0.0
  %1344 = vmatpush.msra.mxu0 0.0
  %1345 = vmatpush.msra.mxu0 0.0
  %1346 = vmatpush.msra.mxu0 0.0
  %1347 = vmatpush.msra.mxu0 0.0
  %1348 = vmatpush.msra.mxu0 %v1280
  %1349 = vmatpush.msra.mxu0 %v1279
  %1350 = vmatpush.msra.mxu0 %v1278
  %1351 = vmatpush.msra.mxu0 %v1277
  %1352 = vmatmul.f32.gmra.mxu0 %v121
  %v1353 = vpop.f32.mrf.mxu0
  %v1354 = vadd.f32 0.0, %v1353
  %1355 = vdwg.mxu0
  %v1356 = vadd.f32 %v1313, %v1354
  %v1357 = vxor.u32 %v1356, 2147483648
  %v1358 = vmul.f32 %v1357, 1.442695
  %v1359 = vpow.pop %v1358
  %v1360 = vadd.f32 %v1359, 1.0
  %v1361 = vrcp.pop %v1360
  %v1362 = vmul.f32 %v1360, %v1361
  %v1363 = vsub.f32 1.0, %v1362
  %v1364 = vmul.f32 %v1361, %v1363
  %v1365 = vadd.f32 %v1361, %v1364
  %vm1366 = vweird.f32 %v1360
  %vm1367 = vweird.f32 %v1361
  %vm1368 = vmor %vm1366, %vm1367
  %v1369 = vsel %vm1368, %v1361, %v1365
  %v1370 = vand.u32 2147483647, %v1360
  %vm1371 = vcmp.eq.f32.partialorder %v1370, 8.507059e+37
  %v1372 = vand.u32 %v1360, 2147483648
  %v1373 = vor.u32 1.1754944e-38, %v1372
  %v1374 = vsel %vm1371, %v1373, %v1369
  %v1375 = vmul.f32 1.0, %v1374
  %1376 = vrot.lane.b32.xlu0 %v1286, 64
  %v1377 = vpop.permute.xlu0 %1376
  %v1379 = vadd.f32 %v1354, %v1377
  %1381 = vrot.lane.b32.xlu0 %v1379, 64
  %v1382 = vpop.permute.xlu0 %1381
  %v1384 = vmul.f32 %v1375, %v1382
  %1386 = vrot.lane.b32.xlu0 %v1384, 64
  %v1387 = vpop.permute.xlu0 %1386
  %v1389 = vadd.f32 %v1313, %v1387
  %v1390 = vtanh.pop %v1389
  %v1391 = vsub.f32 0.0, %v1390
  %1393 = vrot.lane.b32.xlu0 %v1391, 96
  %v1394 = vpop.permute.xlu0 %1393
  %v1396 = vmul.f32 %v1375, %v1394
  %1398 = vrot.lane.b32.xlu0 %v1396, 32
  %v1399 = vpop.permute.xlu0 %1398
  %v1401 = vadd.f32 %v1390, %v1399
  %1403 = vrot.lane.b32.xlu0 %v1401, 64
  %v1404 = vpop.permute.xlu0 %1403
  %v1405 = vsel %vm119, %v1404, 0
  %1407 = vmatpush.msra.mxu0 0.0
  %1408 = vmatpush.msra.mxu0 0.0
  %1409 = vmatpush.msra.mxu0 0.0
  %1410 = vmatpush.msra.mxu0 0.0
  %1411 = vmatpush.msra.mxu0 0.0
  %1412 = vmatpush.msra.mxu0 0.0
  %1413 = vmatpush.msra.mxu0 0.0
  %1414 = vmatpush.msra.mxu0 0.0
  %1415 = vmatpush.msra.mxu0 0.0
  %1416 = vmatpush.msra.mxu0 0.0
  %1417 = vmatpush.msra.mxu0 0.0
  %1418 = vmatpush.msra.mxu0 0.0
  %1419 = vmatpush.msra.mxu0 %v1280
  %1420 = vmatpush.msra.mxu0 %v1279
  %1421 = vmatpush.msra.mxu0 %v1278
  %1422 = vmatpush.msra.mxu0 %v1277
  %1423 = vmatmul.f32.gmra.mxu0 %v1405
  %v1424 = vpop.f32.mrf.mxu0
  %v1425 = vadd.f32 0.0, %v1424
  %1426 = vdwg.mxu0
  %v1427 = vadd.f32 %v1316, %v1425
  %v1428 = vxor.u32 %v1427, 2147483648
  %v1429 = vmul.f32 %v1428, 1.442695
  %v1430 = vpow.pop %v1429
  %v1431 = vadd.f32 %v1430, 1.0
  %v1432 = vrcp.pop %v1431
  %v1433 = vmul.f32 %v1431, %v1432
  %v1434 = vsub.f32 1.0, %v1433
  %v1435 = vmul.f32 %v1432, %v1434
  %v1436 = vadd.f32 %v1432, %v1435
  %vm1437 = vweird.f32 %v1431
  %vm1438 = vweird.f32 %v1432
  %vm1439 = vmor %vm1437, %vm1438
  %v1440 = vsel %vm1439, %v1432, %v1436
  %v1441 = vand.u32 2147483647, %v1431
  %vm1442 = vcmp.eq.f32.partialorder %v1441, 8.507059e+37
  %v1443 = vand.u32 %v1431, 2147483648
  %v1444 = vor.u32 1.1754944e-38, %v1443
  %v1445 = vsel %vm1442, %v1444, %v1440
  %v1446 = vmul.f32 1.0, %v1445
  %v1447 = vadd.f32 %v1425, %v1377
  %1449 = vrot.lane.b32.xlu0 %v1447, 64
  %v1450 = vpop.permute.xlu0 %1449
  %v1452 = vmul.f32 %v1446, %v1450
  %1454 = vrot.lane.b32.xlu0 %v1452, 64
  %v1455 = vpop.permute.xlu0 %1454
  %v1457 = vadd.f32 %v1316, %v1455
  %v1458 = vtanh.pop %v1457
  %v1459 = vsub.f32 %v1401, %v1458
  %1461 = vrot.lane.b32.xlu0 %v1459, 96
  %v1462 = vpop.permute.xlu0 %1461
  %v1464 = vmul.f32 %v1446, %v1462
  %1466 = vrot.lane.b32.xlu0 %v1464, 32
  %v1467 = vpop.permute.xlu0 %1466
  %v1469 = vadd.f32 %v1458, %v1467
  %1471 = vrot.lane.b32.xlu0 %v1469, 64
  %v1472 = vpop.permute.xlu0 %1471
  %v1473 = vsel %vm119, %v1472, 0
  %1475 = vmatpush.msra.mxu0 0.0
  %1476 = vmatpush.msra.mxu0 0.0
  %1477 = vmatpush.msra.mxu0 0.0
  %1478 = vmatpush.msra.mxu0 0.0
  %1479 = vmatpush.msra.mxu0 0.0
  %1480 = vmatpush.msra.mxu0 0.0
  %1481 = vmatpush.msra.mxu0 0.0
  %1482 = vmatpush.msra.mxu0 0.0
  %1483 = vmatpush.msra.mxu0 0.0
  %1484 = vmatpush.msra.mxu0 0.0
  %1485 = vmatpush.msra.mxu0 0.0
  %1486 = vmatpush.msra.mxu0 0.0
  %1487 = vmatpush.msra.mxu0 %v1280
  %1488 = vmatpush.msra.mxu0 %v1279
  %1489 = vmatpush.msra.mxu0 %v1278
  %1490 = vmatpush.msra.mxu0 %v1277
  %1491 = vmatmul.f32.gmra.mxu0 %v1473
  %v1492 = vpop.f32.mrf.mxu0
  %v1493 = vadd.f32 0.0, %v1492
  %1494 = vdwg.mxu0
  %v1495 = vadd.f32 %v1319, %v1493
  %v1496 = vxor.u32 %v1495, 2147483648
  %v1497 = vmul.f32 %v1496, 1.442695
  %v1498 = vpow.pop %v1497
  %v1499 = vadd.f32 %v1498, 1.0
  %v1500 = vrcp.pop %v1499
  %v1501 = vmul.f32 %v1499, %v1500
  %v1502 = vsub.f32 1.0, %v1501
  %v1503 = vmul.f32 %v1500, %v1502
  %v1504 = vadd.f32 %v1500, %v1503
  %vm1505 = vweird.f32 %v1499
  %vm1506 = vweird.f32 %v1500
  %vm1507 = vmor %vm1505, %vm1506
  %v1508 = vsel %vm1507, %v1500, %v1504
  %v1509 = vand.u32 2147483647, %v1499
  %vm1510 = vcmp.eq.f32.partialorder %v1509, 8.507059e+37
  %v1511 = vand.u32 %v1499, 2147483648
  %v1512 = vor.u32 1.1754944e-38, %v1511
  %v1513 = vsel %vm1510, %v1512, %v1508
  %v1514 = vmul.f32 1.0, %v1513
  %v1515 = vadd.f32 %v1493, %v1377
  %1517 = vrot.lane.b32.xlu0 %v1515, 64
  %v1518 = vpop.permute.xlu0 %1517
  %v1520 = vmul.f32 %v1514, %v1518
  %1522 = vrot.lane.b32.xlu0 %v1520, 64
  %v1523 = vpop.permute.xlu0 %1522
  %v1525 = vadd.f32 %v1319, %v1523
  %v1526 = vtanh.pop %v1525
  %v1527 = vsub.f32 %v1469, %v1526
  %1529 = vrot.lane.b32.xlu0 %v1527, 96
  %v1530 = vpop.permute.xlu0 %1529
  %v1532 = vmul.f32 %v1514, %v1530
  %1534 = vrot.lane.b32.xlu0 %v1532, 32
  %v1535 = vpop.permute.xlu0 %1534
  %v1537 = vadd.f32 %v1526, %v1535
  %1539 = vrot.lane.b32.xlu0 %v1537, 64
  %v1540 = vpop.permute.xlu0 %1539
  %v1541 = vsel %vm119, %v1540, 0
  %1543 = vmatpush.msra.mxu0 0.0
  %1544 = vmatpush.msra.mxu0 0.0
  %1545 = vmatpush.msra.mxu0 0.0
  %1546 = vmatpush.msra.mxu0 0.0
  %1547 = vmatpush.msra.mxu0 0.0
  %1548 = vmatpush.msra.mxu0 0.0
  %1549 = vmatpush.msra.mxu0 0.0
  %1550 = vmatpush.msra.mxu0 0.0
  %1551 = vmatpush.msra.mxu0 0.0
  %1552 = vmatpush.msra.mxu0 0.0
  %1553 = vmatpush.msra.mxu0 0.0
  %1554 = vmatpush.msra.mxu0 0.0
  %1555 = vmatpush.msra.mxu0 %v1280
  %1556 = vmatpush.msra.mxu0 %v1279
  %1557 = vmatpush.msra.mxu0 %v1278
  %1558 = vmatpush.msra.mxu0 %v1277
  %1559 = vmatmul.f32.gmra.mxu0 %v1541
  %v1560 = vpop.f32.mrf.mxu0
  %v1561 = vadd.f32 0.0, %v1560
  %1562 = vdwg.mxu0
  %v1563 = vadd.f32 %v1322, %v1561
  %v1564 = vxor.u32 %v1563, 2147483648
  %v1565 = vmul.f32 %v1564, 1.442695
  %v1566 = vpow.pop %v1565
  %v1567 = vadd.f32 %v1566, 1.0
  %v1568 = vrcp.pop %v1567
  %v1569 = vmul.f32 %v1567, %v1568
  %v1570 = vsub.f32 1.0, %v1569
  %v1571 = vmul.f32 %v1568, %v1570
  %v1572 = vadd.f32 %v1568, %v1571
  %vm1573 = vweird.f32 %v1567
  %vm1574 = vweird.f32 %v1568
  %vm1575 = vmor %vm1573, %vm1574
  %v1576 = vsel %vm1575, %v1568, %v1572
  %v1577 = vand.u32 2147483647, %v1567
  %vm1578 = vcmp.eq.f32.partialorder %v1577, 8.507059e+37
  %v1579 = vand.u32 %v1567, 2147483648
  %v1580 = vor.u32 1.1754944e-38, %v1579
  %v1581 = vsel %vm1578, %v1580, %v1576
  %v1582 = vmul.f32 1.0, %v1581
  %v1583 = vadd.f32 %v1561, %v1377
  %1585 = vrot.lane.b32.xlu0 %v1583, 64
  %v1586 = vpop.permute.xlu0 %1585
  %v1588 = vmul.f32 %v1582, %v1586
  %1590 = vrot.lane.b32.xlu0 %v1588, 64
  %v1591 = vpop.permute.xlu0 %1590
  %v1593 = vadd.f32 %v1322, %v1591
  %v1594 = vtanh.pop %v1593
  %v1595 = vsub.f32 %v1537, %v1594
  %1597 = vrot.lane.b32.xlu0 %v1595, 96
  %v1598 = vpop.permute.xlu0 %1597
  %v1600 = vmul.f32 %v1582, %v1598
  %1602 = vrot.lane.b32.xlu0 %v1600, 32
  %v1603 = vpop.permute.xlu0 %1602
  %v1605 = vadd.f32 %v1594, %v1603
  %1607 = vrot.lane.b32.xlu0 %v1605, 64
  %v1608 = vpop.permute.xlu0 %1607
  %v1609 = vsel %vm119, %v1608, 0
  %1611 = vmatpush.msra.mxu0 0.0
  %1612 = vmatpush.msra.mxu0 0.0
  %1613 = vmatpush.msra.mxu0 0.0
  %1614 = vmatpush.msra.mxu0 0.0
  %1615 = vmatpush.msra.mxu0 0.0
  %1616 = vmatpush.msra.mxu0 0.0
  %1617 = vmatpush.msra.mxu0 0.0
  %1618 = vmatpush.msra.mxu0 0.0
  %1619 = vmatpush.msra.mxu0 0.0
  %1620 = vmatpush.msra.mxu0 0.0
  %1621 = vmatpush.msra.mxu0 0.0
  %1622 = vmatpush.msra.mxu0 0.0
  %1623 = vmatpush.msra.mxu0 %v1280
  %1624 = vmatpush.msra.mxu0 %v1279
  %1625 = vmatpush.msra.mxu0 %v1278
  %1626 = vmatpush.msra.mxu0 %v1277
  %1627 = vmatmul.f32.gmra.mxu0 %v1609
  %v1628 = vpop.f32.mrf.mxu0
  %v1629 = vadd.f32 0.0, %v1628
  %1630 = vdwg.mxu0
  %v1631 = vadd.f32 %v1325, %v1629
  %v1632 = vxor.u32 %v1631, 2147483648
  %v1633 = vmul.f32 %v1632, 1.442695
  %v1634 = vpow.pop %v1633
  %v1635 = vadd.f32 %v1634, 1.0
  %v1636 = vrcp.pop %v1635
  %v1637 = vmul.f32 %v1635, %v1636
  %v1638 = vsub.f32 1.0, %v1637
  %v1639 = vmul.f32 %v1636, %v1638
  %v1640 = vadd.f32 %v1636, %v1639
  %vm1641 = vweird.f32 %v1635
  %vm1642 = vweird.f32 %v1636
  %vm1643 = vmor %vm1641, %vm1642
  %v1644 = vsel %vm1643, %v1636, %v1640
  %v1645 = vand.u32 2147483647, %v1635
  %vm1646 = vcmp.eq.f32.partialorder %v1645, 8.507059e+37
  %v1647 = vand.u32 %v1635, 2147483648
  %v1648 = vor.u32 1.1754944e-38, %v1647
  %v1649 = vsel %vm1646, %v1648, %v1644
  %v1650 = vmul.f32 1.0, %v1649
  %v1651 = vadd.f32 %v1629, %v1377
  %1653 = vrot.lane.b32.xlu0 %v1651, 64
  %v1654 = vpop.permute.xlu0 %1653
  %v1656 = vmul.f32 %v1650, %v1654
  %1658 = vrot.lane.b32.xlu0 %v1656, 64
  %v1659 = vpop.permute.xlu0 %1658
  %v1661 = vadd.f32 %v1325, %v1659
  %v1662 = vtanh.pop %v1661
  %v1663 = vsub.f32 %v1605, %v1662
  %1665 = vrot.lane.b32.xlu0 %v1663, 96
  %v1666 = vpop.permute.xlu0 %1665
  %v1668 = vmul.f32 %v1650, %v1666
  %1670 = vrot.lane.b32.xlu0 %v1668, 32
  %v1671 = vpop.permute.xlu0 %1670
  %v1673 = vadd.f32 %v1662, %v1671
  %1675 = vrot.lane.b32.xlu0 %v1673, 64
  %v1676 = vpop.permute.xlu0 %1675
  %v1677 = vsel %vm119, %v1676, 0
  %1679 = vmatpush.msra.mxu0 0.0
  %1680 = vmatpush.msra.mxu0 0.0
  %1681 = vmatpush.msra.mxu0 0.0
  %1682 = vmatpush.msra.mxu0 0.0
  %1683 = vmatpush.msra.mxu0 0.0
  %1684 = vmatpush.msra.mxu0 0.0
  %1685 = vmatpush.msra.mxu0 0.0
  %1686 = vmatpush.msra.mxu0 0.0
  %1687 = vmatpush.msra.mxu0 0.0
  %1688 = vmatpush.msra.mxu0 0.0
  %1689 = vmatpush.msra.mxu0 0.0
  %1690 = vmatpush.msra.mxu0 0.0
  %1691 = vmatpush.msra.mxu0 %v1280
  %1692 = vmatpush.msra.mxu0 %v1279
  %1693 = vmatpush.msra.mxu0 %v1278
  %1694 = vmatpush.msra.mxu0 %v1277
  %1695 = vmatmul.f32.gmra.mxu0 %v1677
  %v1696 = vpop.f32.mrf.mxu0
  %v1697 = vadd.f32 0.0, %v1696
  %1698 = vdwg.mxu0
  %v1699 = vadd.f32 %v1328, %v1697
  %v1700 = vxor.u32 %v1699, 2147483648
  %v1701 = vmul.f32 %v1700, 1.442695
  %v1702 = vpow.pop %v1701
  %v1703 = vadd.f32 %v1702, 1.0
  %v1704 = vrcp.pop %v1703
  %v1705 = vmul.f32 %v1703, %v1704
  %v1706 = vsub.f32 1.0, %v1705
  %v1707 = vmul.f32 %v1704, %v1706
  %v1708 = vadd.f32 %v1704, %v1707
  %vm1709 = vweird.f32 %v1703
  %vm1710 = vweird.f32 %v1704
  %vm1711 = vmor %vm1709, %vm1710
  %v1712 = vsel %vm1711, %v1704, %v1708
  %v1713 = vand.u32 2147483647, %v1703
  %vm1714 = vcmp.eq.f32.partialorder %v1713, 8.507059e+37
  %v1715 = vand.u32 %v1703, 2147483648
  %v1716 = vor.u32 1.1754944e-38, %v1715
  %v1717 = vsel %vm1714, %v1716, %v1712
  %v1718 = vmul.f32 1.0, %v1717
  %v1719 = vadd.f32 %v1697, %v1377
  %1721 = vrot.lane.b32.xlu0 %v1719, 64
  %v1722 = vpop.permute.xlu0 %1721
  %v1724 = vmul.f32 %v1718, %v1722
  %1726 = vrot.lane.b32.xlu0 %v1724, 64
  %v1727 = vpop.permute.xlu0 %1726
  %v1729 = vadd.f32 %v1328, %v1727
  %v1730 = vtanh.pop %v1729
  %v1731 = vsub.f32 %v1673, %v1730
  %1733 = vrot.lane.b32.xlu0 %v1731, 96
  %v1734 = vpop.permute.xlu0 %1733
  %v1736 = vmul.f32 %v1718, %v1734
  %1738 = vrot.lane.b32.xlu0 %v1736, 32
  %v1739 = vpop.permute.xlu0 %1738
  %v1741 = vadd.f32 %v1730, %v1739
  %1743 = vrot.lane.b32.xlu0 %v1741, 64
  %v1744 = vpop.permute.xlu0 %1743
  %v1745 = vsel %vm119, %v1744, 0
  %1747 = vmatpush.msra.mxu0 0.0
  %1748 = vmatpush.msra.mxu0 0.0
  %1749 = vmatpush.msra.mxu0 0.0
  %1750 = vmatpush.msra.mxu0 0.0
  %1751 = vmatpush.msra.mxu0 0.0
  %1752 = vmatpush.msra.mxu0 0.0
  %1753 = vmatpush.msra.mxu0 0.0
  %1754 = vmatpush.msra.mxu0 0.0
  %1755 = vmatpush.msra.mxu0 0.0
  %1756 = vmatpush.msra.mxu0 0.0
  %1757 = vmatpush.msra.mxu0 0.0
  %1758 = vmatpush.msra.mxu0 0.0
  %1759 = vmatpush.msra.mxu0 %v1280
  %1760 = vmatpush.msra.mxu0 %v1279
  %1761 = vmatpush.msra.mxu0 %v1278
  %1762 = vmatpush.msra.mxu0 %v1277
  %1763 = vmatmul.f32.gmra.mxu0 %v1745
  %v1764 = vpop.f32.mrf.mxu0
  %v1765 = vadd.f32 0.0, %v1764
  %1766 = vdwg.mxu0
  %v1767 = vadd.f32 %v1331, %v1765
  %v1768 = vxor.u32 %v1767, 2147483648
  %v1769 = vmul.f32 %v1768, 1.442695
  %v1770 = vpow.pop %v1769
  %v1771 = vadd.f32 %v1770, 1.0
  %v1772 = vrcp.pop %v1771
  %v1773 = vmul.f32 %v1771, %v1772
  %v1774 = vsub.f32 1.0, %v1773
  %v1775 = vmul.f32 %v1772, %v1774
  %v1776 = vadd.f32 %v1772, %v1775
  %vm1777 = vweird.f32 %v1771
  %vm1778 = vweird.f32 %v1772
  %vm1779 = vmor %vm1777, %vm1778
  %v1780 = vsel %vm1779, %v1772, %v1776
  %v1781 = vand.u32 2147483647, %v1771
  %vm1782 = vcmp.eq.f32.partialorder %v1781, 8.507059e+37
  %v1783 = vand.u32 %v1771, 2147483648
  %v1784 = vor.u32 1.1754944e-38, %v1783
  %v1785 = vsel %vm1782, %v1784, %v1780
  %v1786 = vmul.f32 1.0, %v1785
  %v1787 = vadd.f32 %v1765, %v1377
  %1789 = vrot.lane.b32.xlu0 %v1787, 64
  %v1790 = vpop.permute.xlu0 %1789
  %v1792 = vmul.f32 %v1786, %v1790
  %1794 = vrot.lane.b32.xlu0 %v1792, 64
  %v1795 = vpop.permute.xlu0 %1794
  %v1797 = vadd.f32 %v1331, %v1795
  %v1798 = vtanh.pop %v1797
  %v1799 = vsub.f32 %v1741, %v1798
  %1801 = vrot.lane.b32.xlu0 %v1799, 96
  %v1802 = vpop.permute.xlu0 %1801
  %v1804 = vmul.f32 %v1786, %v1802
  %1806 = vrot.lane.b32.xlu0 %v1804, 32
  %v1807 = vpop.permute.xlu0 %1806
  %v1809 = vadd.f32 %v1798, %v1807
  %1811 = vrot.lane.b32.xlu0 %v1809, 64
  %v1812 = vpop.permute.xlu0 %1811
  %v1813 = vsel %vm119, %v1812, 0
  %1815 = vmatpush.msra.mxu0 0.0
  %1816 = vmatpush.msra.mxu0 0.0
  %1817 = vmatpush.msra.mxu0 0.0
  %1818 = vmatpush.msra.mxu0 0.0
  %1819 = vmatpush.msra.mxu0 0.0
  %1820 = vmatpush.msra.mxu0 0.0
  %1821 = vmatpush.msra.mxu0 0.0
  %1822 = vmatpush.msra.mxu0 0.0
  %1823 = vmatpush.msra.mxu0 0.0
  %1824 = vmatpush.msra.mxu0 0.0
  %1825 = vmatpush.msra.mxu0 0.0
  %1826 = vmatpush.msra.mxu0 0.0
  %1827 = vmatpush.msra.mxu0 %v1280
  %1828 = vmatpush.msra.mxu0 %v1279
  %1829 = vmatpush.msra.mxu0 %v1278
  %1830 = vmatpush.msra.mxu0 %v1277
  %1831 = vmatmul.f32.gmra.mxu0 %v1813
  %v1832 = vpop.f32.mrf.mxu0
  %v1833 = vadd.f32 0.0, %v1832
  %1834 = vdwg.mxu0
  %v1835 = vadd.f32 %v1334, %v1833
  %v1836 = vxor.u32 %v1835, 2147483648
  %v1837 = vmul.f32 %v1836, 1.442695
  %v1838 = vpow.pop %v1837
  %v1839 = vadd.f32 %v1838, 1.0
  %v1840 = vrcp.pop %v1839
  %v1841 = vmul.f32 %v1839, %v1840
  %v1842 = vsub.f32 1.0, %v1841
  %v1843 = vmul.f32 %v1840, %v1842
  %v1844 = vadd.f32 %v1840, %v1843
  %vm1845 = vweird.f32 %v1839
  %vm1846 = vweird.f32 %v1840
  %vm1847 = vmor %vm1845, %vm1846
  %v1848 = vsel %vm1847, %v1840, %v1844
  %v1849 = vand.u32 2147483647, %v1839
  %vm1850 = vcmp.eq.f32.partialorder %v1849, 8.507059e+37
  %v1851 = vand.u32 %v1839, 2147483648
  %v1852 = vor.u32 1.1754944e-38, %v1851
  %v1853 = vsel %vm1850, %v1852, %v1848
  %v1854 = vmul.f32 1.0, %v1853
  %v1855 = vadd.f32 %v1833, %v1377
  %1857 = vrot.lane.b32.xlu0 %v1855, 64
  %v1858 = vpop.permute.xlu0 %1857
  %v1860 = vmul.f32 %v1854, %v1858
  %1862 = vrot.lane.b32.xlu0 %v1860, 64
  %v1863 = vpop.permute.xlu0 %1862
  %v1865 = vadd.f32 %v1334, %v1863
  %v1866 = vtanh.pop %v1865
  %v1867 = vsub.f32 %v1809, %v1866
  %1869 = vrot.lane.b32.xlu0 %v1867, 96
  %v1870 = vpop.permute.xlu0 %1869
  %v1872 = vmul.f32 %v1854, %v1870
  %1874 = vrot.lane.b32.xlu0 %v1872, 32
  %v1875 = vpop.permute.xlu0 %1874
  %v1877 = vadd.f32 %v1866, %v1875
  %v1878 = vld [vmem:[%s6] sm:$0xff]
  %v1879 = vld [vmem:[%s6 + $0x8] sm:$0xff]
  %v1880 = vld [vmem:[%s6 + $0x10] sm:$0xff]
  %v1881 = vld [vmem:[%s6 + $0x18] sm:$0xff]
  %v1882 = vld [vmem:[%s7] sm:$0x1]
  %v1884 = vperm.slane %v1882, 0
  %1887 = vrot.lane.b32.xlu0 %v1877, 64
  %v1888 = vpop.permute.xlu0 %1887
  %v1889 = vsel %vm119, %v1888, 0
  %1891 = vmatpush.msra.mxu0 0.0
  %1892 = vmatpush.msra.mxu0 0.0
  %1893 = vmatpush.msra.mxu0 0.0
  %1894 = vmatpush.msra.mxu0 0.0
  %1895 = vmatpush.msra.mxu0 0.0
  %1896 = vmatpush.msra.mxu0 0.0
  %1897 = vmatpush.msra.mxu0 0.0
  %1898 = vmatpush.msra.mxu0 0.0
  %1899 = vmatpush.msra.mxu0 0.0
  %1900 = vmatpush.msra.mxu0 0.0
  %1901 = vmatpush.msra.mxu0 0.0
  %1902 = vmatpush.msra.mxu0 0.0
  %1903 = vmatpush.msra.mxu0 %v1881
  %1904 = vmatpush.msra.mxu0 %v1880
  %1905 = vmatpush.msra.mxu0 %v1879
  %1906 = vmatpush.msra.mxu0 %v1878
  %1907 = vmatmul.f32.gmra.mxu0 %v1405
  %v1908 = vpop.f32.mrf.mxu0
  %v1909 = vadd.f32 %v1884, %v1908
  %1910 = vmatmul.f32.gmra.mxu0 %v1473
  %v1911 = vpop.f32.mrf.mxu0
  %v1912 = vadd.f32 %v1884, %v1911
  %1913 = vmatmul.f32.gmra.mxu0 %v1541
  %v1914 = vpop.f32.mrf.mxu0
  %v1915 = vadd.f32 %v1884, %v1914
  %1916 = vmatmul.f32.gmra.mxu0 %v1609
  %v1917 = vpop.f32.mrf.mxu0
  %v1918 = vadd.f32 %v1884, %v1917
  %1919 = vmatmul.f32.gmra.mxu0 %v1677
  %v1920 = vpop.f32.mrf.mxu0
  %v1921 = vadd.f32 %v1884, %v1920
  %1922 = vmatmul.f32.gmra.mxu0 %v1745
  %v1923 = vpop.f32.mrf.mxu0
  %v1924 = vadd.f32 %v1884, %v1923
  %1925 = vmatmul.f32.gmra.mxu0 %v1813
  %v1926 = vpop.f32.mrf.mxu0
  %v1927 = vadd.f32 %v1884, %v1926
  %1928 = vmatmul.f32.gmra.mxu0 %v1889
  %v1929 = vpop.f32.mrf.mxu0
  %v1930 = vadd.f32 %v1884, %v1929
  %1931 = vdwg.mxu0
  %v1932 = vxor.u32 %v1909, 2147483648
  %v1933 = vxor.u32 %v1912, 2147483648
  %v1934 = vxor.u32 %v1915, 2147483648
  %v1935 = vxor.u32 %v1918, 2147483648
  %v1936 = vxor.u32 %v1921, 2147483648
  %v1937 = vxor.u32 %v1924, 2147483648
  %v1938 = vxor.u32 %v1927, 2147483648
  %v1939 = vxor.u32 %v1930, 2147483648
  %v1940 = vmul.f32 %v1932, 1.442695
  %v1941 = vpow.pop %v1940
  %v1942 = vmul.f32 %v1933, 1.442695
  %v1943 = vpow.pop %v1942
  %v1944 = vmul.f32 %v1934, 1.442695
  %v1945 = vpow.pop %v1944
  %v1946 = vmul.f32 %v1935, 1.442695
  %v1947 = vpow.pop %v1946
  %v1948 = vmul.f32 %v1936, 1.442695
  %v1949 = vpow.pop %v1948
  %v1950 = vmul.f32 %v1937, 1.442695
  %v1951 = vpow.pop %v1950
  %v1952 = vmul.f32 %v1938, 1.442695
  %v1953 = vpow.pop %v1952
  %v1954 = vmul.f32 %v1939, 1.442695
  %v1955 = vpow.pop %v1954
  %v1956 = vadd.f32 %v1941, 1.0
  %v1957 = vadd.f32 %v1943, 1.0
  %v1958 = vadd.f32 %v1945, 1.0
  %v1959 = vadd.f32 %v1947, 1.0
  %v1960 = vadd.f32 %v1949, 1.0
  %v1961 = vadd.f32 %v1951, 1.0
  %v1962 = vadd.f32 %v1953, 1.0
  %v1963 = vadd.f32 %v1955, 1.0
  %v1964 = vrcp.pop %v1956
  %v1965 = vmul.f32 %v1956, %v1964
  %v1966 = vsub.f32 1.0, %v1965
  %v1967 = vmul.f32 %v1964, %v1966
  %v1968 = vadd.f32 %v1964, %v1967
  %vm1969 = vweird.f32 %v1956
  %vm1970 = vweird.f32 %v1964
  %vm1971 = vmor %vm1969, %vm1970
  %v1972 = vsel %vm1971, %v1964, %v1968
  %v1973 = vand.u32 2147483647, %v1956
  %vm1974 = vcmp.eq.f32.partialorder %v1973, 8.507059e+37
  %v1975 = vand.u32 %v1956, 2147483648
  %v1976 = vor.u32 1.1754944e-38, %v1975
  %v1977 = vsel %vm1974, %v1976, %v1972
  %v1978 = vmul.f32 1.0, %v1977
  %v1979 = vrcp.pop %v1957
  %v1980 = vmul.f32 %v1957, %v1979
  %v1981 = vsub.f32 1.0, %v1980
  %v1982 = vmul.f32 %v1979, %v1981
  %v1983 = vadd.f32 %v1979, %v1982
  %vm1984 = vweird.f32 %v1957
  %vm1985 = vweird.f32 %v1979
  %vm1986 = vmor %vm1984, %vm1985
  %v1987 = vsel %vm1986, %v1979, %v1983
  %v1988 = vand.u32 2147483647, %v1957
  %vm1989 = vcmp.eq.f32.partialorder %v1988, 8.507059e+37
  %v1990 = vand.u32 %v1957, 2147483648
  %v1991 = vor.u32 1.1754944e-38, %v1990
  %v1992 = vsel %vm1989, %v1991, %v1987
  %v1993 = vmul.f32 1.0, %v1992
  %v1994 = vrcp.pop %v1958
  %v1995 = vmul.f32 %v1958, %v1994
  %v1996 = vsub.f32 1.0, %v1995
  %v1997 = vmul.f32 %v1994, %v1996
  %v1998 = vadd.f32 %v1994, %v1997
  %vm1999 = vweird.f32 %v1958
  %vm2000 = vweird.f32 %v1994
  %vm2001 = vmor %vm1999, %vm2000
  %v2002 = vsel %vm2001, %v1994, %v1998
  %v2003 = vand.u32 2147483647, %v1958
  %vm2004 = vcmp.eq.f32.partialorder %v2003, 8.507059e+37
  %v2005 = vand.u32 %v1958, 2147483648
  %v2006 = vor.u32 1.1754944e-38, %v2005
  %v2007 = vsel %vm2004, %v2006, %v2002
  %v2008 = vmul.f32 1.0, %v2007
  %v2009 = vrcp.pop %v1959
  %v2010 = vmul.f32 %v1959, %v2009
  %v2011 = vsub.f32 1.0, %v2010
  %v2012 = vmul.f32 %v2009, %v2011
  %v2013 = vadd.f32 %v2009, %v2012
  %vm2014 = vweird.f32 %v1959
  %vm2015 = vweird.f32 %v2009
  %vm2016 = vmor %vm2014, %vm2015
  %v2017 = vsel %vm2016, %v2009, %v2013
  %v2018 = vand.u32 2147483647, %v1959
  %vm2019 = vcmp.eq.f32.partialorder %v2018, 8.507059e+37
  %v2020 = vand.u32 %v1959, 2147483648
  %v2021 = vor.u32 1.1754944e-38, %v2020
  %v2022 = vsel %vm2019, %v2021, %v2017
  %v2023 = vmul.f32 1.0, %v2022
  %v2024 = vrcp.pop %v1960
  %v2025 = vmul.f32 %v1960, %v2024
  %v2026 = vsub.f32 1.0, %v2025
  %v2027 = vmul.f32 %v2024, %v2026
  %v2028 = vadd.f32 %v2024, %v2027
  %vm2029 = vweird.f32 %v1960
  %vm2030 = vweird.f32 %v2024
  %vm2031 = vmor %vm2029, %vm2030
  %v2032 = vsel %vm2031, %v2024, %v2028
  %v2033 = vand.u32 2147483647, %v1960
  %vm2034 = vcmp.eq.f32.partialorder %v2033, 8.507059e+37
  %v2035 = vand.u32 %v1960, 2147483648
  %v2036 = vor.u32 1.1754944e-38, %v2035
  %v2037 = vsel %vm2034, %v2036, %v2032
  %v2038 = vmul.f32 1.0, %v2037
  %v2039 = vrcp.pop %v1961
  %v2040 = vmul.f32 %v1961, %v2039
  %v2041 = vsub.f32 1.0, %v2040
  %v2042 = vmul.f32 %v2039, %v2041
  %v2043 = vadd.f32 %v2039, %v2042
  %vm2044 = vweird.f32 %v1961
  %vm2045 = vweird.f32 %v2039
  %vm2046 = vmor %vm2044, %vm2045
  %v2047 = vsel %vm2046, %v2039, %v2043
  %v2048 = vand.u32 2147483647, %v1961
  %vm2049 = vcmp.eq.f32.partialorder %v2048, 8.507059e+37
  %v2050 = vand.u32 %v1961, 2147483648
  %v2051 = vor.u32 1.1754944e-38, %v2050
  %v2052 = vsel %vm2049, %v2051, %v2047
  %v2053 = vmul.f32 1.0, %v2052
  %v2054 = vrcp.pop %v1962
  %v2055 = vmul.f32 %v1962, %v2054
  %v2056 = vsub.f32 1.0, %v2055
  %v2057 = vmul.f32 %v2054, %v2056
  %v2058 = vadd.f32 %v2054, %v2057
  %vm2059 = vweird.f32 %v1962
  %vm2060 = vweird.f32 %v2054
  %vm2061 = vmor %vm2059, %vm2060
  %v2062 = vsel %vm2061, %v2054, %v2058
  %v2063 = vand.u32 2147483647, %v1962
  %vm2064 = vcmp.eq.f32.partialorder %v2063, 8.507059e+37
  %v2065 = vand.u32 %v1962, 2147483648
  %v2066 = vor.u32 1.1754944e-38, %v2065
  %v2067 = vsel %vm2064, %v2066, %v2062
  %v2068 = vmul.f32 1.0, %v2067
  %v2069 = vrcp.pop %v1963
  %v2070 = vmul.f32 %v1963, %v2069
  %v2071 = vsub.f32 1.0, %v2070
  %v2072 = vmul.f32 %v2069, %v2071
  %v2073 = vadd.f32 %v2069, %v2072
  %vm2074 = vweird.f32 %v1963
  %vm2075 = vweird.f32 %v2069
  %vm2076 = vmor %vm2074, %vm2075
  %v2077 = vsel %vm2076, %v2069, %v2073
  %v2078 = vand.u32 2147483647, %v1963
  %vm2079 = vcmp.eq.f32.partialorder %v2078, 8.507059e+37
  %v2080 = vand.u32 %v1963, 2147483648
  %v2081 = vor.u32 1.1754944e-38, %v2080
  %v2082 = vsel %vm2079, %v2081, %v2077
  %v2083 = vmul.f32 1.0, %v2082
  %2084 = vst.msk [vmem:[%s8] sm:$0xff] %vm49, %v1978
  %2085 = vst.msk [vmem:[%s8 + $0x8] sm:$0xff] %vm49, %v1993
  %2086 = vst.msk [vmem:[%s8 + $0x10] sm:$0xff] %vm49, %v2008
  %2087 = vst.msk [vmem:[%s8 + $0x18] sm:$0xff] %vm49, %v2023
  %2088 = vst.msk [vmem:[%s8 + $0x20] sm:$0xff] %vm49, %v2038
  %2089 = vst.msk [vmem:[%s8 + $0x28] sm:$0xff] %vm49, %v2053
  %2090 = vst.msk [vmem:[%s8 + $0x30] sm:$0xff] %vm49, %v2068
  %2091 = vst.msk [vmem:[%s8 + $0x38] sm:$0xff] %vm49, %v2083
  // Predicated region
  $region34: #{basic_gru_forward.1} parent=0 // pred_check
    _
  $region35: #{basic_gru_forward.1} parent=0 // pred_check_branch
    %2093 = sbr.rel (0) target = $region37
  $region36: #{basic_gru_forward.1} parent=0 // pred_region
    _
  $region37: #{basic_gru_forward.1} parent=0 // pred_fallthru
    _
  // Predicated region
  $region38: #{basic_gru_forward.1} parent=0 // pred_check
    _
  $region39: #{basic_gru_forward.1} parent=0 // pred_check_branch
    %2095 = sbr.rel (0) target = $region41
  $region40: #{basic_gru_forward.1} parent=0 // pred_region
    _
  $region41: #{basic_gru_forward.1} parent=0 // pred_fallthru
    _

</llo_original>
